<compile_context>
chip_gen: v5e
topology: v5e:2x2
jax: 0.10.0
libtpu: 0.0.40
codegen_flags: <defaults>
</compile_context>

<pallas_src>
import math
from functools import partial

import jax
import jax.numpy as jnp
from jax import lax
from jax.experimental import pallas as pl
from jax.experimental.pallas import tpu as pltpu


_VMEM_LIMIT = 48 * 1024 * 1024  # sized to fit comfortably within v7x's 64 MiB VMEM


def _pick_tile(n, candidates):
    """Largest candidate tile (multiple of 8/128) evenly dividing n, else n."""
    for c in candidates:
        if c <= n and n % c == 0:
            return c
    return n


# ---------------------------------------------------------------------------
# Kernel 1: tiled dense linear  y = x @ W + b   (W stored as [d_in, d_out])
# ---------------------------------------------------------------------------
def _linear_kernel(x_ref, w_ref, b_ref, o_ref, acc_ref):
    k_idx = pl.program_id(1)

    @pl.when(k_idx == 0)
    def _():
        acc_ref[...] = jnp.zeros(acc_ref.shape, acc_ref.dtype)

    # NOTE: for production on v6e/v7x, cast operands to bf16 here (keep the
    # f32 accumulation).  Kept in the input dtype so the f32 reference check
    # in __main__ stays tight.
    acc_ref[...] += jnp.dot(x_ref[...], w_ref[...],
                            preferred_element_type=jnp.float32)

    @pl.when(k_idx == pl.num_programs(1) - 1)
    def _():
        o_ref[...] = (acc_ref[...] + b_ref[...]).astype(o_ref.dtype)


def linear(x, w, b):
    # x: [M, d_in], w: [d_in, d_out], b: [1, d_out]
    M, d_in = x.shape
    d_out = w.shape[1]
    tm = _pick_tile(M, (512, 256, 128, 64, 32, 16, 8))
    tk = _pick_tile(d_in, (1024, 512, 256, 128))
    grid = (M // tm, d_in // tk)
    return pl.pallas_call(
        _linear_kernel,
        out_shape=jax.ShapeDtypeStruct((M, d_out), x.dtype),
        grid=grid,
        in_specs=[
            pl.BlockSpec((tm, tk), lambda i, k: (i, k)),
            pl.BlockSpec((tk, d_out), lambda i, k: (k, 0)),   # weight resident over rows
            pl.BlockSpec((1, d_out), lambda i, k: (0, 0)),    # bias resident
        ],
        out_specs=pl.BlockSpec((tm, d_out), lambda i, k: (i, 0)),
        scratch_shapes=[pltpu.VMEM((tm, d_out), jnp.float32)],
        compiler_params=pltpu.CompilerParams(
            dimension_semantics=("parallel", "arbitrary"),
            vmem_limit_bytes=_VMEM_LIMIT),
    )(x, w, b)


# ---------------------------------------------------------------------------
# Kernel 2: flash-style attention over [B, S, d_model] (heads in the lane dim)
# ---------------------------------------------------------------------------
def _flash_attn_kernel(q_ref, k_ref, v_ref, o_ref, m_ref, l_ref, acc_ref,
                       *, num_heads, d_k, scale):
    kv = pl.program_id(2)

    @pl.when(kv == 0)
    def _():
        m_ref[...] = jnp.full(m_ref.shape, -jnp.inf, m_ref.dtype)
        l_ref[...] = jnp.zeros(l_ref.shape, l_ref.dtype)
        acc_ref[...] = jnp.zeros(acc_ref.shape, acc_ref.dtype)

    q = q_ref[0]          # (tq,  d_model) -- all heads, lane-dense, fetched once per q tile
    k = k_ref[0]          # (tkv, d_model) -- streamed over the kv axis
    v = v_ref[0]

    for h in range(num_heads):       # static unroll; all heads share this K/V tile
        lo = h * d_k
        qh = q[:, lo:lo + d_k]
        kh = k[:, lo:lo + d_k]
        vh = v[:, lo:lo + d_k]

        # contract the last dims of q and k directly (no kh.T / XLU transpose)
        s = lax.dot_general(qh, kh, (((1,), (1,)), ((), ())),
                            preferred_element_type=jnp.float32) * scale

        m_prev = m_ref[h]                                          # (tq, 1)
        m_new = jnp.maximum(m_prev, jnp.max(s, axis=-1, keepdims=True))
        alpha = jnp.exp(m_prev - m_new)
        p = jnp.exp(s - m_new)
        l_ref[h] = alpha * l_ref[h] + jnp.sum(p, axis=-1, keepdims=True)
        acc_ref[h] = alpha * acc_ref[h] + jnp.dot(
            p.astype(vh.dtype), vh, preferred_element_type=jnp.float32)
        m_ref[h] = m_new

    @pl.when(kv == pl.num_programs(2) - 1)
    def _():
        outs = []
        for h in range(num_heads):
            inv = pl.reciprocal(l_ref[h], approx=True)   # EUP slot, ~free
            outs.append(acc_ref[h] * inv)
        # single lane-dense (tq, d_model) store; heads merged in the lane dim
        o_ref[0] = jnp.concatenate(outs, axis=-1).astype(o_ref.dtype)


def flash_attention(q, k, v, num_heads):
    # q, k, v: [B, S, d_model] with heads packed along the last (lane) dim
    B, S, d_model = q.shape
    d_k = d_model // num_heads
    tq = _pick_tile(S, (256, 128, 64, 32, 16, 8))
    tkv = _pick_tile(S, (256, 128, 64, 32, 16, 8))
    grid = (B, S // tq, S // tkv)

    q_spec = pl.BlockSpec((1, tq, d_model), lambda b, qi, kv: (b, qi, 0))
    kv_spec = pl.BlockSpec((1, tkv, d_model), lambda b, qi, kv: (b, kv, 0))
    o_spec = pl.BlockSpec((1, tq, d_model), lambda b, qi, kv: (b, qi, 0))

    kernel = partial(_flash_attn_kernel, num_heads=num_heads, d_k=d_k,
                     scale=1.0 / math.sqrt(d_k))
    return pl.pallas_call(
        kernel,
        out_shape=jax.ShapeDtypeStruct((B, S, d_model), q.dtype),
        grid=grid,
        in_specs=[q_spec, kv_spec, kv_spec],
        out_specs=o_spec,
        scratch_shapes=[
            pltpu.VMEM((num_heads, tq, 1), jnp.float32),     # running max
            pltpu.VMEM((num_heads, tq, 1), jnp.float32),     # running denominator
            pltpu.VMEM((num_heads, tq, d_k), jnp.float32),   # output accumulator
        ],
        compiler_params=pltpu.CompilerParams(
            dimension_semantics=("parallel", "parallel", "arbitrary"),
            vmem_limit_bytes=_VMEM_LIMIT),
    )(q, k, v)


# ---------------------------------------------------------------------------
# MultiHeadedAttention forward (no transposes: everything stays [B,S,d_model])
# ---------------------------------------------------------------------------
def multi_headed_attention(params, query, key, value, h):
    B, S, d_model = query.shape

    def project(x, w, b):
        return linear(x.reshape(B * S, d_model), w, b).reshape(B, S, d_model)

    # NOTE: for self-attention (query is key is value) the three projections
    # can be fused into a single [d_model, 3*d_model] GEMM so x is read once;
    # kept separate here to preserve the module's generic q/k/v semantics.
    q = project(query, params["wq"], params["bq"])
    k = project(key, params["wk"], params["bk"])
    v = project(value, params["wv"], params["bv"])

    x = flash_attention(q, k, v, h)                 # [B, S, d_model], heads merged
    out = linear(x.reshape(B * S, d_model), params["wo"], params["bo"])
    return out.reshape(B, S, d_model)


def init_params(key, d_model, dtype=jnp.float32):
    ks = jax.random.split(key, 8)
    scale = 1.0 / math.sqrt(d_model)

    def w(k):
        return jax.random.uniform(k, (d_model, d_model), dtype,
                                  minval=-scale, maxval=scale)

    def b(k):
        return jax.random.uniform(k, (1, d_model), dtype,
                                  minval=-scale, maxval=scale)

    return {
        "wq": w(ks[0]), "bq": b(ks[1]),
        "wk": w(ks[2]), "bk": b(ks[3]),
        "wv": w(ks[4]), "bv": b(ks[5]),
        "wo": w(ks[6]), "bo": b(ks[7]),
    }


# pure-JAX reference for a sanity check
def _reference(params, query, key, value, h):
    B, S, d_model = query.shape
    d_k = d_model // h

    def proj(x, w, b):
        return (x @ w + b[0]).reshape(B, S, h, d_k).transpose(0, 2, 1, 3)

    q = proj(query, params["wq"], params["bq"])
    k = proj(key, params["wk"], params["bk"])
    v = proj(value, params["wv"], params["bv"])
    scores = jnp.einsum("bhqd,bhkd->bhqk", q, k) / math.sqrt(d_k)
    p = jax.nn.softmax(scores, axis=-1)
    x = jnp.einsum("bhqk,bhkd->bhqd", p, v)
    x = x.transpose(0, 2, 1, 3).reshape(B, S, d_model)
    return x @ params["wo"] + params["bo"][0]


if __name__ == "__main__":
    B, S, d_model, h = 2, 8, 32, 4

    root = jax.random.PRNGKey(0)
    kq, kk, kv_, kp = jax.random.split(root, 4)
    query = jax.random.normal(kq, (B, S, d_model), jnp.float32)
    key_ = jax.random.normal(kk, (B, S, d_model), jnp.float32)
    value = jax.random.normal(kv_, (B, S, d_model), jnp.float32)
    params = init_params(kp, d_model)

    fwd = jax.jit(partial(multi_headed_attention, h=h))
    out = jax.block_until_ready(fwd(params, query, key_, value))

    ref = _reference(params, query, key_, value, h)
    assert out.shape == (B, S, d_model)
    # tolerance accounts for the approximate EUP reciprocal in the softmax
    assert jnp.allclose(out, ref, atol=2e-3, rtol=2e-3), "mismatch vs reference"

    print("KERNEL_OK")
</pallas_src>

<mosaic_0001>
module attributes {stable_mosaic.version = 11 : i64} {
  func.func @_linear_kernel(%arg0: i32, %arg1: i32, %arg2: memref<16x32xf32, #tpu.memory_space<vmem>>, %arg3: memref<32x32xf32, #tpu.memory_space<vmem>>, %arg4: memref<1x32xf32, #tpu.memory_space<vmem>>, %arg5: memref<16x32xf32, #tpu.memory_space<vmem>>, %arg6: memref<16x32xf32, #tpu.memory_space<vmem>>) attributes {dimension_semantics = [#tpu.dimension_semantics<parallel>, #tpu.dimension_semantics<arbitrary>], iteration_bounds = array<i64: 1, 1>, scalar_prefetch = 0 : i64, scratch_operands = 1 : i64, tpu.core_type = #tpu.core_type<tc>, window_params = [{transform_indices = @transform_0, window_bounds = array<i64: 16, 32>}, {transform_indices = @transform_1, window_bounds = array<i64: 32, 32>}, {pipeline_mode = #tpu.pipeline_mode<synchronous>, transform_indices = @transform_2, window_bounds = array<i64: 1, 32>}, {transform_indices = @transform_3, window_bounds = array<i64: 16, 32>}]} {
    %c0_i32 = arith.constant 0 : i32
    %0 = arith.cmpi eq, %arg1, %c0_i32 : i32
    %1 = arith.extui %0 : i1 to i32
    %c0_i32_0 = arith.constant 0 : i32
    %2 = arith.cmpi ne, %1, %c0_i32_0 : i32
    scf.if %2 {
      %cst_10 = arith.constant 0.000000e+00 : f32
      %12 = vector.broadcast %cst_10 : f32 to vector<16x32xf32>
      %c0_11 = arith.constant 0 : index
      %c0_12 = arith.constant 0 : index
      %13 = vector.load %arg6[%c0_11, %c0_12] : memref<16x32xf32, #tpu.memory_space<vmem>>, vector<16x32xf32>
      tpu.vector_store %arg6[%c0_11, %c0_12], %12 {strides = array<i32>} : memref<16x32xf32, #tpu.memory_space<vmem>>, vector<16x32xf32>,
    } else {
    }
    %c0 = arith.constant 0 : index
    %c0_1 = arith.constant 0 : index
    %3 = vector.load %arg6[%c0, %c0_1] : memref<16x32xf32, #tpu.memory_space<vmem>>, vector<16x32xf32>
    %c0_2 = arith.constant 0 : index
    %c0_3 = arith.constant 0 : index
    %4 = vector.load %arg2[%c0_2, %c0_3] : memref<16x32xf32, #tpu.memory_space<vmem>>, vector<16x32xf32>
    %c0_4 = arith.constant 0 : index
    %c0_5 = arith.constant 0 : index
    %5 = vector.load %arg3[%c0_4, %c0_5] : memref<32x32xf32, #tpu.memory_space<vmem>>, vector<32x32xf32>
    %cst = arith.constant dense<0.000000e+00> : vector<16x32xf32>
    %6 = tpu.matmul %4, %5, %cst {dimension_numbers = #tpu.dot_dimension_numbers<[1], [0], [0], [1], [0, 0, 1, 1], [], []>} : vector<16x32xf32>, vector<32x32xf32>, vector<16x32xf32> -> vector<16x32xf32>
    %7 = arith.addf %3, %6 : vector<16x32xf32>
    %c0_6 = arith.constant 0 : index
    %c0_7 = arith.constant 0 : index
    %8 = vector.load %arg6[%c0_6, %c0_7] : memref<16x32xf32, #tpu.memory_space<vmem>>, vector<16x32xf32>
    tpu.vector_store %arg6[%c0_6, %c0_7], %7 {strides = array<i32>} : memref<16x32xf32, #tpu.memory_space<vmem>>, vector<16x32xf32>,
    %c0_i32_8 = arith.constant 0 : i32
    %9 = arith.cmpi eq, %arg1, %c0_i32_8 : i32
    %10 = arith.extui %9 : i1 to i32
    %c0_i32_9 = arith.constant 0 : i32
    %11 = arith.cmpi ne, %10, %c0_i32_9 : i32
    scf.if %11 {
      %c0_10 = arith.constant 0 : index
      %c0_11 = arith.constant 0 : index
      %12 = vector.load %arg6[%c0_10, %c0_11] : memref<16x32xf32, #tpu.memory_space<vmem>>, vector<16x32xf32>
      %c0_12 = arith.constant 0 : index
      %c0_13 = arith.constant 0 : index
      %13 = vector.load %arg4[%c0_12, %c0_13] : memref<1x32xf32, #tpu.memory_space<vmem>>, vector<1x32xf32>
      %14 = vector.broadcast %13 : vector<1x32xf32> to vector<16x32xf32>
      %15 = arith.addf %12, %14 : vector<16x32xf32>
      %c0_14 = arith.constant 0 : index
      %c0_15 = arith.constant 0 : index
      %16 = vector.load %arg5[%c0_14, %c0_15] : memref<16x32xf32, #tpu.memory_space<vmem>>, vector<16x32xf32>
      tpu.vector_store %arg5[%c0_14, %c0_15], %15 {strides = array<i32>} : memref<16x32xf32, #tpu.memory_space<vmem>>, vector<16x32xf32>,
    } else {
    }
    return
  }
  func.func @transform_0(%arg0: i32, %arg1: i32) -> (i32, i32) {
    %c0_i32 = arith.constant 0 : i32
    return %arg0, %arg1 : i32, i32
  }
  func.func @transform_1(%arg0: i32, %arg1: i32) -> (i32, i32) {
    %c0_i32 = arith.constant 0 : i32
    %c0_i32_0 = arith.constant 0 : i32
    return %arg1, %c0_i32 : i32, i32
  }
  func.func @transform_2(%arg0: i32, %arg1: i32) -> (i32, i32) {
    %c0_i32 = arith.constant 0 : i32
    %c0_i32_0 = arith.constant 0 : i32
    %c0_i32_1 = arith.constant 0 : i32
    return %c0_i32, %c0_i32_0 : i32, i32
  }
  func.func @transform_3(%arg0: i32, %arg1: i32) -> (i32, i32) {
    %c0_i32 = arith.constant 0 : i32
    %c0_i32_0 = arith.constant 0 : i32
    return %arg0, %c0_i32 : i32, i32
  }
}

module attributes {stable_mosaic.version = 11 : i64} {
  func.func @_linear_kernel(%arg0: i32, %arg1: i32, %arg2: memref<16x32xf32, #tpu.memory_space<vmem>>, %arg3: memref<32x32xf32, #tpu.memory_space<vmem>>, %arg4: memref<1x32xf32, #tpu.memory_space<vmem>>, %arg5: memref<16x32xf32, #tpu.memory_space<vmem>>, %arg6: memref<16x32xf32, #tpu.memory_space<vmem>>) attributes {dimension_semantics = [#tpu.dimension_semantics<parallel>, #tpu.dimension_semantics<arbitrary>], iteration_bounds = array<i64: 1, 1>, scalar_prefetch = 0 : i64, scratch_operands = 1 : i64, tpu.core_type = #tpu.core_type<tc>, window_params = [{transform_indices = @transform_0, window_bounds = array<i64: 16, 32>}, {transform_indices = @transform_1, window_bounds = array<i64: 32, 32>}, {pipeline_mode = #tpu.pipeline_mode<synchronous>, transform_indices = @transform_2, window_bounds = array<i64: 1, 32>}, {transform_indices = @transform_3, window_bounds = array<i64: 16, 32>}]} {
    %c0_i32 = arith.constant 0 : i32
    %0 = arith.cmpi eq, %arg1, %c0_i32 : i32
    %1 = arith.extui %0 : i1 to i32
    %c0_i32_0 = arith.constant 0 : i32
    %2 = arith.cmpi ne, %1, %c0_i32_0 : i32
    scf.if %2 {
      %cst_10 = arith.constant 0.000000e+00 : f32
      %12 = vector.broadcast %cst_10 : f32 to vector<16x32xf32>
      %c0_11 = arith.constant 0 : index
      %c0_12 = arith.constant 0 : index
      %13 = vector.load %arg6[%c0_11, %c0_12] : memref<16x32xf32, #tpu.memory_space<vmem>>, vector<16x32xf32>
      tpu.vector_store %arg6[%c0_11, %c0_12], %12 {strides = array<i32>} : memref<16x32xf32, #tpu.memory_space<vmem>>, vector<16x32xf32>,
    } else {
    }
    %c0 = arith.constant 0 : index
    %c0_1 = arith.constant 0 : index
    %3 = vector.load %arg6[%c0, %c0_1] : memref<16x32xf32, #tpu.memory_space<vmem>>, vector<16x32xf32>
    %c0_2 = arith.constant 0 : index
    %c0_3 = arith.constant 0 : index
    %4 = vector.load %arg2[%c0_2, %c0_3] : memref<16x32xf32, #tpu.memory_space<vmem>>, vector<16x32xf32>
    %c0_4 = arith.constant 0 : index
    %c0_5 = arith.constant 0 : index
    %5 = vector.load %arg3[%c0_4, %c0_5] : memref<32x32xf32, #tpu.memory_space<vmem>>, vector<32x32xf32>
    %cst = arith.constant dense<0.000000e+00> : vector<16x32xf32>
    %6 = tpu.matmul %4, %5, %cst {dimension_numbers = #tpu.dot_dimension_numbers<[1], [0], [0], [1], [0, 0, 1, 1], [], []>} : vector<16x32xf32>, vector<32x32xf32>, vector<16x32xf32> -> vector<16x32xf32>
    %7 = arith.addf %3, %6 : vector<16x32xf32>
    %c0_6 = arith.constant 0 : index
    %c0_7 = arith.constant 0 : index
    %8 = vector.load %arg6[%c0_6, %c0_7] : memref<16x32xf32, #tpu.memory_space<vmem>>, vector<16x32xf32>
    tpu.vector_store %arg6[%c0_6, %c0_7], %7 {strides = array<i32>} : memref<16x32xf32, #tpu.memory_space<vmem>>, vector<16x32xf32>,
    %c0_i32_8 = arith.constant 0 : i32
    %9 = arith.cmpi eq, %arg1, %c0_i32_8 : i32
    %10 = arith.extui %9 : i1 to i32
    %c0_i32_9 = arith.constant 0 : i32
    %11 = arith.cmpi ne, %10, %c0_i32_9 : i32
    scf.if %11 {
      %c0_10 = arith.constant 0 : index
      %c0_11 = arith.constant 0 : index
      %12 = vector.load %arg6[%c0_10, %c0_11] : memref<16x32xf32, #tpu.memory_space<vmem>>, vector<16x32xf32>
      %c0_12 = arith.constant 0 : index
      %c0_13 = arith.constant 0 : index
      %13 = vector.load %arg4[%c0_12, %c0_13] : memref<1x32xf32, #tpu.memory_space<vmem>>, vector<1x32xf32>
      %14 = vector.broadcast %13 : vector<1x32xf32> to vector<16x32xf32>
      %15 = arith.addf %12, %14 : vector<16x32xf32>
      %c0_14 = arith.constant 0 : index
      %c0_15 = arith.constant 0 : index
      %16 = vector.load %arg5[%c0_14, %c0_15] : memref<16x32xf32, #tpu.memory_space<vmem>>, vector<16x32xf32>
      tpu.vector_store %arg5[%c0_14, %c0_15], %15 {strides = array<i32>} : memref<16x32xf32, #tpu.memory_space<vmem>>, vector<16x32xf32>,
    } else {
    }
    return
  }
  func.func @transform_0(%arg0: i32, %arg1: i32) -> (i32, i32) {
    %c0_i32 = arith.constant 0 : i32
    return %arg0, %arg1 : i32, i32
  }
  func.func @transform_1(%arg0: i32, %arg1: i32) -> (i32, i32) {
    %c0_i32 = arith.constant 0 : i32
    %c0_i32_0 = arith.constant 0 : i32
    return %arg1, %c0_i32 : i32, i32
  }
  func.func @transform_2(%arg0: i32, %arg1: i32) -> (i32, i32) {
    %c0_i32 = arith.constant 0 : i32
    %c0_i32_0 = arith.constant 0 : i32
    %c0_i32_1 = arith.constant 0 : i32
    return %c0_i32, %c0_i32_0 : i32, i32
  }
  func.func @transform_3(%arg0: i32, %arg1: i32) -> (i32, i32) {
    %c0_i32 = arith.constant 0 : i32
    %c0_i32_0 = arith.constant 0 : i32
    return %arg0, %c0_i32 : i32, i32
  }
}

module attributes {stable_mosaic.version = 11 : i64} {
  func.func @_flash_attn_kernel(%arg0: i32, %arg1: i32, %arg2: i32, %arg3: memref<1x8x32xf32, #tpu.memory_space<vmem>>, %arg4: memref<1x8x32xf32, #tpu.memory_space<vmem>>, %arg5: memref<1x8x32xf32, #tpu.memory_space<vmem>>, %arg6: memref<1x8x32xf32, #tpu.memory_space<vmem>>, %arg7: memref<4x8x1xf32, #tpu.memory_space<vmem>>, %arg8: memref<4x8x1xf32, #tpu.memory_space<vmem>>, %arg9: memref<4x8x8xf32, #tpu.memory_space<vmem>>) attributes {dimension_semantics = [#tpu.dimension_semantics<parallel>, #tpu.dimension_semantics<parallel>, #tpu.dimension_semantics<arbitrary>], iteration_bounds = array<i64: 2, 1, 1>, scalar_prefetch = 0 : i64, scratch_operands = 3 : i64, tpu.core_type = #tpu.core_type<tc>, window_params = [{transform_indices = @transform_0, window_bounds = array<i64: 1, 8, 32>}, {transform_indices = @transform_1, window_bounds = array<i64: 1, 8, 32>}, {transform_indices = @transform_2, window_bounds = array<i64: 1, 8, 32>}, {transform_indices = @transform_3, window_bounds = array<i64: 1, 8, 32>}]} {
    %c0_i32 = arith.constant 0 : i32
    %0 = arith.cmpi eq, %arg2, %c0_i32 : i32
    %1 = arith.extui %0 : i1 to i32
    %c0_i32_0 = arith.constant 0 : i32
    %2 = arith.cmpi ne, %1, %c0_i32_0 : i32
    scf.if %2 {
      %cst_99 = arith.constant 0xFF800000 : f32
      %160 = vector.broadcast %cst_99 : f32 to vector<4x8x1xf32>
      %c0_100 = arith.constant 0 : index
      %c0_101 = arith.constant 0 : index
      %c0_102 = arith.constant 0 : index
      %161 = vector.load %arg7[%c0_100, %c0_101, %c0_102] : memref<4x8x1xf32, #tpu.memory_space<vmem>>, vector<4x8x1xf32>
      tpu.vector_store %arg7[%c0_100, %c0_101, %c0_102], %160 {strides = array<i32>} : memref<4x8x1xf32, #tpu.memory_space<vmem>>, vector<4x8x1xf32>,
      %cst_103 = arith.constant 0.000000e+00 : f32
      %162 = vector.broadcast %cst_103 : f32 to vector<4x8x1xf32>
      %c0_104 = arith.constant 0 : index
      %c0_105 = arith.constant 0 : index
      %c0_106 = arith.constant 0 : index
      %163 = vector.load %arg8[%c0_104, %c0_105, %c0_106] : memref<4x8x1xf32, #tpu.memory_space<vmem>>, vector<4x8x1xf32>
      tpu.vector_store %arg8[%c0_104, %c0_105, %c0_106], %162 {strides = array<i32>} : memref<4x8x1xf32, #tpu.memory_space<vmem>>, vector<4x8x1xf32>,
      %cst_107 = arith.constant 0.000000e+00 : f32
      %164 = vector.broadcast %cst_107 : f32 to vector<4x8x8xf32>
      %c0_108 = arith.constant 0 : index
      %c0_109 = arith.constant 0 : index
      %c0_110 = arith.constant 0 : index
      %165 = vector.load %arg9[%c0_108, %c0_109, %c0_110] : memref<4x8x8xf32, #tpu.memory_space<vmem>>, vector<4x8x8xf32>
      tpu.vector_store %arg9[%c0_108, %c0_109, %c0_110], %164 {strides = array<i32>} : memref<4x8x8xf32, #tpu.memory_space<vmem>>, vector<4x8x8xf32>,
    } else {
    }
    %c0 = arith.constant 0 : index
    %c0_1 = arith.constant 0 : index
    %c0_2 = arith.constant 0 : index
    %3 = vector.load %arg3[%c0, %c0_1, %c0_2] : memref<1x8x32xf32, #tpu.memory_space<vmem>>, vector<1x8x32xf32>
    %4 = vector.shape_cast %3 : vector<1x8x32xf32> to vector<8x32xf32>
    %c0_3 = arith.constant 0 : index
    %c0_4 = arith.constant 0 : index
    %c0_5 = arith.constant 0 : index
    %5 = vector.load %arg4[%c0_3, %c0_4, %c0_5] : memref<1x8x32xf32, #tpu.memory_space<vmem>>, vector<1x8x32xf32>
    %6 = vector.shape_cast %5 : vector<1x8x32xf32> to vector<8x32xf32>
    %c0_6 = arith.constant 0 : index
    %c0_7 = arith.constant 0 : index
    %c0_8 = arith.constant 0 : index
    %7 = vector.load %arg5[%c0_6, %c0_7, %c0_8] : memref<1x8x32xf32, #tpu.memory_space<vmem>>, vector<1x8x32xf32>
    %8 = vector.shape_cast %7 : vector<1x8x32xf32> to vector<8x32xf32>
    %9 = vector.extract_strided_slice %4 {offsets = [0, 0], sizes = [8, 8], strides = [1, 1]} : vector<8x32xf32> to vector<8x8xf32>
    %10 = vector.extract_strided_slice %6 {offsets = [0, 0], sizes = [8, 8], strides = [1, 1]} : vector<8x32xf32> to vector<8x8xf32>
    %11 = vector.extract_strided_slice %8 {offsets = [0, 0], sizes = [8, 8], strides = [1, 1]} : vector<8x32xf32> to vector<8x8xf32>
    %cst = arith.constant dense<0.000000e+00> : vector<8x8xf32>
    %12 = tpu.matmul %9, %10, %cst {dimension_numbers = #tpu.dot_dimension_numbers<[1], [1], [0], [0], [0, 0, 1, 0], [], []>} : vector<8x8xf32>, vector<8x8xf32>, vector<8x8xf32> -> vector<8x8xf32>
    %cst_9 = arith.constant 0.353553385 : f32
    %13 = vector.broadcast %cst_9 : f32 to vector<8x8xf32>
    %14 = arith.mulf %12, %13 : vector<8x8xf32>
    %c0_10 = arith.constant 0 : index
    %c0_11 = arith.constant 0 : index
    %c0_12 = arith.constant 0 : index
    %15 = vector.load %arg7[%c0_10, %c0_11, %c0_12] : memref<4x8x1xf32, #tpu.memory_space<vmem>>, vector<1x8x1xf32>
    %16 = vector.shape_cast %15 : vector<1x8x1xf32> to vector<8x1xf32>
    %cst_13 = arith.constant dense<0xFF800000> : vector<8xf32>
    %17 = vector.multi_reduction <maximumf>, %14, %cst_13 [1] : vector<8x8xf32> to vector<8xf32>
    %18 = vector.shape_cast %17 : vector<8xf32> to vector<8x1xf32>
    %19 = arith.maximumf %16, %18 : vector<8x1xf32>
    %20 = arith.subf %16, %19 : vector<8x1xf32>
    %21 = math.exp %20 : vector<8x1xf32>
    %22 = vector.broadcast %19 : vector<8x1xf32> to vector<8x8xf32>
    %23 = arith.subf %14, %22 : vector<8x8xf32>
    %24 = math.exp %23 : vector<8x8xf32>
    %c0_14 = arith.constant 0 : index
    %c0_15 = arith.constant 0 : index
    %c0_16 = arith.constant 0 : index
    %25 = vector.load %arg8[%c0_14, %c0_15, %c0_16] : memref<4x8x1xf32, #tpu.memory_space<vmem>>, vector<1x8x1xf32>
    %26 = vector.shape_cast %25 : vector<1x8x1xf32> to vector<8x1xf32>
    %27 = arith.mulf %21, %26 : vector<8x1xf32>
    %cst_17 = arith.constant dense<0.000000e+00> : vector<8xf32>
    %28 = vector.multi_reduction <add>, %24, %cst_17 [1] : vector<8x8xf32> to vector<8xf32>
    %29 = vector.shape_cast %28 : vector<8xf32> to vector<8x1xf32>
    %30 = arith.addf %27, %29 : vector<8x1xf32>
    %c0_18 = arith.constant 0 : index
    %c0_19 = arith.constant 0 : index
    %c0_20 = arith.constant 0 : index
    %31 = vector.load %arg8[%c0_18, %c0_19, %c0_20] : memref<4x8x1xf32, #tpu.memory_space<vmem>>, vector<1x8x1xf32>
    %32 = vector.shape_cast %31 : vector<1x8x1xf32> to vector<8x1xf32>
    %33 = vector.shape_cast %30 : vector<8x1xf32> to vector<1x8x1xf32>
    tpu.vector_store %arg8[%c0_18, %c0_19, %c0_20], %33 {strides = array<i32>} : memref<4x8x1xf32, #tpu.memory_space<vmem>>, vector<1x8x1xf32>,
    %c0_21 = arith.constant 0 : index
    %c0_22 = arith.constant 0 : index
    %c0_23 = arith.constant 0 : index
    %34 = vector.load %arg9[%c0_21, %c0_22, %c0_23] : memref<4x8x8xf32, #tpu.memory_space<vmem>>, vector<1x8x8xf32>
    %35 = vector.shape_cast %34 : vector<1x8x8xf32> to vector<8x8xf32>
    %36 = vector.broadcast %21 : vector<8x1xf32> to vector<8x8xf32>
    %37 = arith.mulf %36, %35 : vector<8x8xf32>
    %cst_24 = arith.constant dense<0.000000e+00> : vector<8x8xf32>
    %38 = tpu.matmul %24, %11, %cst_24 {dimension_numbers = #tpu.dot_dimension_numbers<[1], [0], [0], [1], [0, 0, 1, 1], [], []>} : vector<8x8xf32>, vector<8x8xf32>, vector<8x8xf32> -> vector<8x8xf32>
    %39 = arith.addf %37, %38 : vector<8x8xf32>
    %c0_25 = arith.constant 0 : index
    %c0_26 = arith.constant 0 : index
    %c0_27 = arith.constant 0 : index
    %40 = vector.load %arg9[%c0_25, %c0_26, %c0_27] : memref<4x8x8xf32, #tpu.memory_space<vmem>>, vector<1x8x8xf32>
    %41 = vector.shape_cast %40 : vector<1x8x8xf32> to vector<8x8xf32>
    %42 = vector.shape_cast %39 : vector<8x8xf32> to vector<1x8x8xf32>
    tpu.vector_store %arg9[%c0_25, %c0_26, %c0_27], %42 {strides = array<i32>} : memref<4x8x8xf32, #tpu.memory_space<vmem>>, vector<1x8x8xf32>,
    %c0_28 = arith.constant 0 : index
    %c0_29 = arith.constant 0 : index
    %c0_30 = arith.constant 0 : index
    %43 = vector.load %arg7[%c0_28, %c0_29, %c0_30] : memref<4x8x1xf32, #tpu.memory_space<vmem>>, vector<1x8x1xf32>
    %44 = vector.shape_cast %43 : vector<1x8x1xf32> to vector<8x1xf32>
    %45 = vector.shape_cast %19 : vector<8x1xf32> to vector<1x8x1xf32>
    tpu.vector_store %arg7[%c0_28, %c0_29, %c0_30], %45 {strides = array<i32>} : memref<4x8x1xf32, #tpu.memory_space<vmem>>, vector<1x8x1xf32>,
    %46 = vector.extract_strided_slice %4 {offsets = [0, 8], sizes = [8, 8], strides = [1, 1]} : vector<8x32xf32> to vector<8x8xf32>
    %47 = vector.extract_strided_slice %6 {offsets = [0, 8], sizes = [8, 8], strides = [1, 1]} : vector<8x32xf32> to vector<8x8xf32>
    %48 = vector.extract_strided_slice %8 {offsets = [0, 8], sizes = [8, 8], strides = [1, 1]} : vector<8x32xf32> to vector<8x8xf32>
    %cst_31 = arith.constant dense<0.000000e+00> : vector<8x8xf32>
    %49 = tpu.matmul %46, %47, %cst_31 {dimension_numbers = #tpu.dot_dimension_numbers<[1], [1], [0], [0], [0, 0, 1, 0], [], []>} : vector<8x8xf32>, vector<8x8xf32>, vector<8x8xf32> -> vector<8x8xf32>
    %cst_32 = arith.constant 0.353553385 : f32
    %50 = vector.broadcast %cst_32 : f32 to vector<8x8xf32>
    %51 = arith.mulf %49, %50 : vector<8x8xf32>
    %c1 = arith.constant 1 : index
    %c0_33 = arith.constant 0 : index
    %c0_34 = arith.constant 0 : index
    %52 = vector.load %arg7[%c1, %c0_33, %c0_34] : memref<4x8x1xf32, #tpu.memory_space<vmem>>, vector<1x8x1xf32>
    %53 = vector.shape_cast %52 : vector<1x8x1xf32> to vector<8x1xf32>
    %cst_35 = arith.constant dense<0xFF800000> : vector<8xf32>
    %54 = vector.multi_reduction <maximumf>, %51, %cst_35 [1] : vector<8x8xf32> to vector<8xf32>
    %55 = vector.shape_cast %54 : vector<8xf32> to vector<8x1xf32>
    %56 = arith.maximumf %53, %55 : vector<8x1xf32>
    %57 = arith.subf %53, %56 : vector<8x1xf32>
    %58 = math.exp %57 : vector<8x1xf32>
    %59 = vector.broadcast %56 : vector<8x1xf32> to vector<8x8xf32>
    %60 = arith.subf %51, %59 : vector<8x8xf32>
    %61 = math.exp %60 : vector<8x8xf32>
    %c1_36 = arith.constant 1 : index
    %c0_37 = arith.constant 0 : index
    %c0_38 = arith.constant 0 : index
    %62 = vector.load %arg8[%c1_36, %c0_37, %c0_38] : memref<4x8x1xf32, #tpu.memory_space<vmem>>, vector<1x8x1xf32>
    %63 = vector.shape_cast %62 : vector<1x8x1xf32> to vector<8x1xf32>
    %64 = arith.mulf %58, %63 : vector<8x1xf32>
    %cst_39 = arith.constant dense<0.000000e+00> : vector<8xf32>
    %65 = vector.multi_reduction <add>, %61, %cst_39 [1] : vector<8x8xf32> to vector<8xf32>
    %66 = vector.shape_cast %65 : vector<8xf32> to vector<8x1xf32>
    %67 = arith.addf %64, %66 : vector<8x1xf32>
    %c1_40 = arith.constant 1 : index
    %c0_41 = arith.constant 0 : index
    %c0_42 = arith.constant 0 : index
    %68 = vector.load %arg8[%c1_40, %c0_41, %c0_42] : memref<4x8x1xf32, #tpu.memory_space<vmem>>, vector<1x8x1xf32>
    %69 = vector.shape_cast %68 : vector<1x8x1xf32> to vector<8x1xf32>
    %70 = vector.shape_cast %67 : vector<8x1xf32> to vector<1x8x1xf32>
    tpu.vector_store %arg8[%c1_40, %c0_41, %c0_42], %70 {strides = array<i32>} : memref<4x8x1xf32, #tpu.memory_space<vmem>>, vector<1x8x1xf32>,
    %c1_43 = arith.constant 1 : index
    %c0_44 = arith.constant 0 : index
    %c0_45 = arith.constant 0 : index
    %71 = vector.load %arg9[%c1_43, %c0_44, %c0_45] : memref<4x8x8xf32, #tpu.memory_space<vmem>>, vector<1x8x8xf32>
    %72 = vector.shape_cast %71 : vector<1x8x8xf32> to vector<8x8xf32>
    %73 = vector.broadcast %58 : vector<8x1xf32> to vector<8x8xf32>
    %74 = arith.mulf %73, %72 : vector<8x8xf32>
    %cst_46 = arith.constant dense<0.000000e+00> : vector<8x8xf32>
    %75 = tpu.matmul %61, %48, %cst_46 {dimension_numbers = #tpu.dot_dimension_numbers<[1], [0], [0], [1], [0, 0, 1, 1], [], []>} : vector<8x8xf32>, vector<8x8xf32>, vector<8x8xf32> -> vector<8x8xf32>
    %76 = arith.addf %74, %75 : vector<8x8xf32>
    %c1_47 = arith.constant 1 : index
    %c0_48 = arith.constant 0 : index
    %c0_49 = arith.constant 0 : index
    %77 = vector.load %arg9[%c1_47, %c0_48, %c0_49] : memref<4x8x8xf32, #tpu.memory_space<vmem>>, vector<1x8x8xf32>
    %78 = vector.shape_cast %77 : vector<1x8x8xf32> to vector<8x8xf32>
    %79 = vector.shape_cast %76 : vector<8x8xf32> to vector<1x8x8xf32>
    tpu.vector_store %arg9[%c1_47, %c0_48, %c0_49], %79 {strides = array<i32>} : memref<4x8x8xf32, #tpu.memory_space<vmem>>, vector<1x8x8xf32>,
    %c1_50 = arith.constant 1 : index
    %c0_51 = arith.constant 0 : index
    %c0_52 = arith.constant 0 : index
    %80 = vector.load %arg7[%c1_50, %c0_51, %c0_52] : memref<4x8x1xf32, #tpu.memory_space<vmem>>, vector<1x8x1xf32>
    %81 = vector.shape_cast %80 : vector<1x8x1xf32> to vector<8x1xf32>
    %82 = vector.shape_cast %56 : vector<8x1xf32> to vector<1x8x1xf32>
    tpu.vector_store %arg7[%c1_50, %c0_51, %c0_52], %82 {strides = array<i32>} : memref<4x8x1xf32, #tpu.memory_space<vmem>>, vector<1x8x1xf32>,
    %83 = vector.extract_strided_slice %4 {offsets = [0, 16], sizes = [8, 8], strides = [1, 1]} : vector<8x32xf32> to vector<8x8xf32>
    %84 = vector.extract_strided_slice %6 {offsets = [0, 16], sizes = [8, 8], strides = [1, 1]} : vector<8x32xf32> to vector<8x8xf32>
    %85 = vector.extract_strided_slice %8 {offsets = [0, 16], sizes = [8, 8], strides = [1, 1]} : vector<8x32xf32> to vector<8x8xf32>
    %cst_53 = arith.constant dense<0.000000e+00> : vector<8x8xf32>
    %86 = tpu.matmul %83, %84, %cst_53 {dimension_numbers = #tpu.dot_dimension_numbers<[1], [1], [0], [0], [0, 0, 1, 0], [], []>} : vector<8x8xf32>, vector<8x8xf32>, vector<8x8xf32> -> vector<8x8xf32>
    %cst_54 = arith.constant 0.353553385 : f32
    %87 = vector.broadcast %cst_54 : f32 to vector<8x8xf32>
    %88 = arith.mulf %86, %87 : vector<8x8xf32>
    %c2 = arith.constant 2 : index
    %c0_55 = arith.constant 0 : index
    %c0_56 = arith.constant 0 : index
    %89 = vector.load %arg7[%c2, %c0_55, %c0_56] : memref<4x8x1xf32, #tpu.memory_space<vmem>>, vector<1x8x1xf32>
    %90 = vector.shape_cast %89 : vector<1x8x1xf32> to vector<8x1xf32>
    %cst_57 = arith.constant dense<0xFF800000> : vector<8xf32>
    %91 = vector.multi_reduction <maximumf>, %88, %cst_57 [1] : vector<8x8xf32> to vector<8xf32>
    %92 = vector.shape_cast %91 : vector<8xf32> to vector<8x1xf32>
    %93 = arith.maximumf %90, %92 : vector<8x1xf32>
    %94 = arith.subf %90, %93 : vector<8x1xf32>
    %95 = math.exp %94 : vector<8x1xf32>
    %96 = vector.broadcast %93 : vector<8x1xf32> to vector<8x8xf32>
    %97 = arith.subf %88, %96 : vector<8x8xf32>
    %98 = math.exp %97 : vector<8x8xf32>
    %c2_58 = arith.constant 2 : index
    %c0_59 = arith.constant 0 : index
    %c0_60 = arith.constant 0 : index
    %99 = vector.load %arg8[%c2_58, %c0_59, %c0_60] : memref<4x8x1xf32, #tpu.memory_space<vmem>>, vector<1x8x1xf32>
    %100 = vector.shape_cast %99 : vector<1x8x1xf32> to vector<8x1xf32>
    %101 = arith.mulf %95, %100 : vector<8x1xf32>
    %cst_61 = arith.constant dense<0.000000e+00> : vector<8xf32>
    %102 = vector.multi_reduction <add>, %98, %cst_61 [1] : vector<8x8xf32> to vector<8xf32>
    %103 = vector.shape_cast %102 : vector<8xf32> to vector<8x1xf32>
    %104 = arith.addf %101, %103 : vector<8x1xf32>
    %c2_62 = arith.constant 2 : index
    %c0_63 = arith.constant 0 : index
    %c0_64 = arith.constant 0 : index
    %105 = vector.load %arg8[%c2_62, %c0_63, %c0_64] : memref<4x8x1xf32, #tpu.memory_space<vmem>>, vector<1x8x1xf32>
    %106 = vector.shape_cast %105 : vector<1x8x1xf32> to vector<8x1xf32>
    %107 = vector.shape_cast %104 : vector<8x1xf32> to vector<1x8x1xf32>
    tpu.vector_store %arg8[%c2_62, %c0_63, %c0_64], %107 {strides = array<i32>} : memref<4x8x1xf32, #tpu.memory_space<vmem>>, vector<1x8x1xf32>,
    %c2_65 = arith.constant 2 : index
    %c0_66 = arith.constant 0 : index
    %c0_67 = arith.constant 0 : index
    %108 = vector.load %arg9[%c2_65, %c0_66, %c0_67] : memref<4x8x8xf32, #tpu.memory_space<vmem>>, vector<1x8x8xf32>
    %109 = vector.shape_cast %108 : vector<1x8x8xf32> to vector<8x8xf32>
    %110 = vector.broadcast %95 : vector<8x1xf32> to vector<8x8xf32>
    %111 = arith.mulf %110, %109 : vector<8x8xf32>
    %cst_68 = arith.constant dense<0.000000e+00> : vector<8x8xf32>
    %112 = tpu.matmul %98, %85, %cst_68 {dimension_numbers = #tpu.dot_dimension_numbers<[1], [0], [0], [1], [0, 0, 1, 1], [], []>} : vector<8x8xf32>, vector<8x8xf32>, vector<8x8xf32> -> vector<8x8xf32>
    %113 = arith.addf %111, %112 : vector<8x8xf32>
    %c2_69 = arith.constant 2 : index
    %c0_70 = arith.constant 0 : index
    %c0_71 = arith.constant 0 : index
    %114 = vector.load %arg9[%c2_69, %c0_70, %c0_71] : memref<4x8x8xf32, #tpu.memory_space<vmem>>, vector<1x8x8xf32>
    %115 = vector.shape_cast %114 : vector<1x8x8xf32> to vector<8x8xf32>
    %116 = vector.shape_cast %113 : vector<8x8xf32> to vector<1x8x8xf32>
    tpu.vector_store %arg9[%c2_69, %c0_70, %c0_71], %116 {strides = array<i32>} : memref<4x8x8xf32, #tpu.memory_space<vmem>>, vector<1x8x8xf32>,
    %c2_72 = arith.constant 2 : index
    %c0_73 = arith.constant 0 : index
    %c0_74 = arith.constant 0 : index
    %117 = vector.load %arg7[%c2_72, %c0_73, %c0_74] : memref<4x8x1xf32, #tpu.memory_space<vmem>>, vector<1x8x1xf32>
    %118 = vector.shape_cast %117 : vector<1x8x1xf32> to vector<8x1xf32>
    %119 = vector.shape_cast %93 : vector<8x1xf32> to vector<1x8x1xf32>
    tpu.vector_store %arg7[%c2_72, %c0_73, %c0_74], %119 {strides = array<i32>} : memref<4x8x1xf32, #tpu.memory_space<vmem>>, vector<1x8x1xf32>,
    %120 = vector.extract_strided_slice %4 {offsets = [0, 24], sizes = [8, 8], strides = [1, 1]} : vector<8x32xf32> to vector<8x8xf32>
    %121 = vector.extract_strided_slice %6 {offsets = [0, 24], sizes = [8, 8], strides = [1, 1]} : vector<8x32xf32> to vector<8x8xf32>
    %122 = vector.extract_strided_slice %8 {offsets = [0, 24], sizes = [8, 8], strides = [1, 1]} : vector<8x32xf32> to vector<8x8xf32>
    %cst_75 = arith.constant dense<0.000000e+00> : vector<8x8xf32>
    %123 = tpu.matmul %120, %121, %cst_75 {dimension_numbers = #tpu.dot_dimension_numbers<[1], [1], [0], [0], [0, 0, 1, 0], [], []>} : vector<8x8xf32>, vector<8x8xf32>, vector<8x8xf32> -> vector<8x8xf32>
    %cst_76 = arith.constant 0.353553385 : f32
    %124 = vector.broadcast %cst_76 : f32 to vector<8x8xf32>
    %125 = arith.mulf %123, %124 : vector<8x8xf32>
    %c3 = arith.constant 3 : index
    %c0_77 = arith.constant 0 : index
    %c0_78 = arith.constant 0 : index
    %126 = vector.load %arg7[%c3, %c0_77, %c0_78] : memref<4x8x1xf32, #tpu.memory_space<vmem>>, vector<1x8x1xf32>
    %127 = vector.shape_cast %126 : vector<1x8x1xf32> to vector<8x1xf32>
    %cst_79 = arith.constant dense<0xFF800000> : vector<8xf32>
    %128 = vector.multi_reduction <maximumf>, %125, %cst_79 [1] : vector<8x8xf32> to vector<8xf32>
    %129 = vector.shape_cast %128 : vector<8xf32> to vector<8x1xf32>
    %130 = arith.maximumf %127, %129 : vector<8x1xf32>
    %131 = arith.subf %127, %130 : vector<8x1xf32>
    %132 = math.exp %131 : vector<8x1xf32>
    %133 = vector.broadcast %130 : vector<8x1xf32> to vector<8x8xf32>
    %134 = arith.subf %125, %133 : vector<8x8xf32>
    %135 = math.exp %134 : vector<8x8xf32>
    %c3_80 = arith.constant 3 : index
    %c0_81 = arith.constant 0 : index
    %c0_82 = arith.constant 0 : index
    %136 = vector.load %arg8[%c3_80, %c0_81, %c0_82] : memref<4x8x1xf32, #tpu.memory_space<vmem>>, vector<1x8x1xf32>
    %137 = vector.shape_cast %136 : vector<1x8x1xf32> to vector<8x1xf32>
    %138 = arith.mulf %132, %137 : vector<8x1xf32>
    %cst_83 = arith.constant dense<0.000000e+00> : vector<8xf32>
    %139 = vector.multi_reduction <add>, %135, %cst_83 [1] : vector<8x8xf32> to vector<8xf32>
    %140 = vector.shape_cast %139 : vector<8xf32> to vector<8x1xf32>
    %141 = arith.addf %138, %140 : vector<8x1xf32>
    %c3_84 = arith.constant 3 : index
    %c0_85 = arith.constant 0 : index
    %c0_86 = arith.constant 0 : index
    %142 = vector.load %arg8[%c3_84, %c0_85, %c0_86] : memref<4x8x1xf32, #tpu.memory_space<vmem>>, vector<1x8x1xf32>
    %143 = vector.shape_cast %142 : vector<1x8x1xf32> to vector<8x1xf32>
    %144 = vector.shape_cast %141 : vector<8x1xf32> to vector<1x8x1xf32>
    tpu.vector_store %arg8[%c3_84, %c0_85, %c0_86], %144 {strides = array<i32>} : memref<4x8x1xf32, #tpu.memory_space<vmem>>, vector<1x8x1xf32>,
    %c3_87 = arith.constant 3 : index
    %c0_88 = arith.constant 0 : index
    %c0_89 = arith.constant 0 : index
    %145 = vector.load %arg9[%c3_87, %c0_88, %c0_89] : memref<4x8x8xf32, #tpu.memory_space<vmem>>, vector<1x8x8xf32>
    %146 = vector.shape_cast %145 : vector<1x8x8xf32> to vector<8x8xf32>
    %147 = vector.broadcast %132 : vector<8x1xf32> to vector<8x8xf32>
    %148 = arith.mulf %147, %146 : vector<8x8xf32>
    %cst_90 = arith.constant dense<0.000000e+00> : vector<8x8xf32>
    %149 = tpu.matmul %135, %122, %cst_90 {dimension_numbers = #tpu.dot_dimension_numbers<[1], [0], [0], [1], [0, 0, 1, 1], [], []>} : vector<8x8xf32>, vector<8x8xf32>, vector<8x8xf32> -> vector<8x8xf32>
    %150 = arith.addf %148, %149 : vector<8x8xf32>
    %c3_91 = arith.constant 3 : index
    %c0_92 = arith.constant 0 : index
    %c0_93 = arith.constant 0 : index
    %151 = vector.load %arg9[%c3_91, %c0_92, %c0_93] : memref<4x8x8xf32, #tpu.memory_space<vmem>>, vector<1x8x8xf32>
    %152 = vector.shape_cast %151 : vector<1x8x8xf32> to vector<8x8xf32>
    %153 = vector.shape_cast %150 : vector<8x8xf32> to vector<1x8x8xf32>
    tpu.vector_store %arg9[%c3_91, %c0_92, %c0_93], %153 {strides = array<i32>} : memref<4x8x8xf32, #tpu.memory_space<vmem>>, vector<1x8x8xf32>,
    %c3_94 = arith.constant 3 : index
    %c0_95 = arith.constant 0 : index
    %c0_96 = arith.constant 0 : index
    %154 = vector.load %arg7[%c3_94, %c0_95, %c0_96] : memref<4x8x1xf32, #tpu.memory_space<vmem>>, vector<1x8x1xf32>
    %155 = vector.shape_cast %154 : vector<1x8x1xf32> to vector<8x1xf32>
    %156 = vector.shape_cast %130 : vector<8x1xf32> to vector<1x8x1xf32>
    tpu.vector_store %arg7[%c3_94, %c0_95, %c0_96], %156 {strides = array<i32>} : memref<4x8x1xf32, #tpu.memory_space<vmem>>, vector<1x8x1xf32>,
    %c0_i32_97 = arith.constant 0 : i32
    %157 = arith.cmpi eq, %arg2, %c0_i32_97 : i32
    %158 = arith.extui %157 : i1 to i32
    %c0_i32_98 = arith.constant 0 : i32
    %159 = arith.cmpi ne, %158, %c0_i32_98 : i32
    scf.if %159 {
      %c0_99 = arith.constant 0 : index
      %c0_100 = arith.constant 0 : index
      %c0_101 = arith.constant 0 : index
      %160 = vector.load %arg8[%c0_99, %c0_100, %c0_101] : memref<4x8x1xf32, #tpu.memory_space<vmem>>, vector<1x8x1xf32>
      %161 = vector.shape_cast %160 : vector<1x8x1xf32> to vector<8x1xf32>
      %162 = tpu.reciprocal %161 {approx = true} : vector<8x1xf32> -> vector<8x1xf32>
      %c0_102 = arith.constant 0 : index
      %c0_103 = arith.constant 0 : index
      %c0_104 = arith.constant 0 : index
      %163 = vector.load %arg9[%c0_102, %c0_103, %c0_104] : memref<4x8x8xf32, #tpu.memory_space<vmem>>, vector<1x8x8xf32>
      %164 = vector.shape_cast %163 : vector<1x8x8xf32> to vector<8x8xf32>
      %165 = vector.broadcast %162 : vector<8x1xf32> to vector<8x8xf32>
      %166 = arith.mulf %164, %165 : vector<8x8xf32>
      %c1_105 = arith.constant 1 : index
      %c0_106 = arith.constant 0 : index
      %c0_107 = arith.constant 0 : index
      %167 = vector.load %arg8[%c1_105, %c0_106, %c0_107] : memref<4x8x1xf32, #tpu.memory_space<vmem>>, vector<1x8x1xf32>
      %168 = vector.shape_cast %167 : vector<1x8x1xf32> to vector<8x1xf32>
      %169 = tpu.reciprocal %168 {approx = true} : vector<8x1xf32> -> vector<8x1xf32>
      %c1_108 = arith.constant 1 : index
      %c0_109 = arith.constant 0 : index
      %c0_110 = arith.constant 0 : index
      %170 = vector.load %arg9[%c1_108, %c0_109, %c0_110] : memref<4x8x8xf32, #tpu.memory_space<vmem>>, vector<1x8x8xf32>
      %171 = vector.shape_cast %170 : vector<1x8x8xf32> to vector<8x8xf32>
      %172 = vector.broadcast %169 : vector<8x1xf32> to vector<8x8xf32>
      %173 = arith.mulf %171, %172 : vector<8x8xf32>
      %c2_111 = arith.constant 2 : index
      %c0_112 = arith.constant 0 : index
      %c0_113 = arith.constant 0 : index
      %174 = vector.load %arg8[%c2_111, %c0_112, %c0_113] : memref<4x8x1xf32, #tpu.memory_space<vmem>>, vector<1x8x1xf32>
      %175 = vector.shape_cast %174 : vector<1x8x1xf32> to vector<8x1xf32>
      %176 = tpu.reciprocal %175 {approx = true} : vector<8x1xf32> -> vector<8x1xf32>
      %c2_114 = arith.constant 2 : index
      %c0_115 = arith.constant 0 : index
      %c0_116 = arith.constant 0 : index
      %177 = vector.load %arg9[%c2_114, %c0_115, %c0_116] : memref<4x8x8xf32, #tpu.memory_space<vmem>>, vector<1x8x8xf32>
      %178 = vector.shape_cast %177 : vector<1x8x8xf32> to vector<8x8xf32>
      %179 = vector.broadcast %176 : vector<8x1xf32> to vector<8x8xf32>
      %180 = arith.mulf %178, %179 : vector<8x8xf32>
      %c3_117 = arith.constant 3 : index
      %c0_118 = arith.constant 0 : index
      %c0_119 = arith.constant 0 : index
      %181 = vector.load %arg8[%c3_117, %c0_118, %c0_119] : memref<4x8x1xf32, #tpu.memory_space<vmem>>, vector<1x8x1xf32>
      %182 = vector.shape_cast %181 : vector<1x8x1xf32> to vector<8x1xf32>
      %183 = tpu.reciprocal %182 {approx = true} : vector<8x1xf32> -> vector<8x1xf32>
      %c3_120 = arith.constant 3 : index
      %c0_121 = arith.constant 0 : index
      %c0_122 = arith.constant 0 : index
      %184 = vector.load %arg9[%c3_120, %c0_121, %c0_122] : memref<4x8x8xf32, #tpu.memory_space<vmem>>, vector<1x8x8xf32>
      %185 = vector.shape_cast %184 : vector<1x8x8xf32> to vector<8x8xf32>
      %186 = vector.broadcast %183 : vector<8x1xf32> to vector<8x8xf32>
      %187 = arith.mulf %185, %186 : vector<8x8xf32>
      %188 = tpu.concatenate %166, %173, %180, %187 in 1 : vector<8x8xf32>, vector<8x8xf32>, vector<8x8xf32>, vector<8x8xf32> -> vector<8x32xf32>
      %c0_123 = arith.constant 0 : index
      %c0_124 = arith.constant 0 : index
      %c0_125 = arith.constant 0 : index
      %189 = vector.load %arg6[%c0_123, %c0_124, %c0_125] : memref<1x8x32xf32, #tpu.memory_space<vmem>>, vector<1x8x32xf32>
      %190 = vector.shape_cast %189 : vector<1x8x32xf32> to vector<8x32xf32>
      %191 = vector.shape_cast %188 : vector<8x32xf32> to vector<1x8x32xf32>
      tpu.vector_store %arg6[%c0_123, %c0_124, %c0_125], %191 {strides = array<i32>} : memref<1x8x32xf32, #tpu.memory_space<vmem>>, vector<1x8x32xf32>,
    } else {
    }
    return
  }
  func.func @transform_0(%arg0: i32, %arg1: i32, %arg2: i32) -> (i32, i32, i32) {
    %c0_i32 = arith.constant 0 : i32
    %c0_i32_0 = arith.constant 0 : i32
    return %arg0, %arg1, %c0_i32 : i32, i32, i32
  }
  func.func @transform_1(%arg0: i32, %arg1: i32, %arg2: i32) -> (i32, i32, i32) {
    %c0_i32 = arith.constant 0 : i32
    %c0_i32_0 = arith.constant 0 : i32
    return %arg0, %arg2, %c0_i32 : i32, i32, i32
  }
  func.func @transform_2(%arg0: i32, %arg1: i32, %arg2: i32) -> (i32, i32, i32) {
    %c0_i32 = arith.constant 0 : i32
    %c0_i32_0 = arith.constant 0 : i32
    return %arg0, %arg2, %c0_i32 : i32, i32, i32
  }
  func.func @transform_3(%arg0: i32, %arg1: i32, %arg2: i32) -> (i32, i32, i32) {
    %c0_i32 = arith.constant 0 : i32
    %c0_i32_0 = arith.constant 0 : i32
    return %arg0, %arg1, %c0_i32 : i32, i32, i32
  }
}

module attributes {stable_mosaic.version = 11 : i64} {
  func.func @_linear_kernel(%arg0: i32, %arg1: i32, %arg2: memref<16x32xf32, #tpu.memory_space<vmem>>, %arg3: memref<32x32xf32, #tpu.memory_space<vmem>>, %arg4: memref<1x32xf32, #tpu.memory_space<vmem>>, %arg5: memref<16x32xf32, #tpu.memory_space<vmem>>, %arg6: memref<16x32xf32, #tpu.memory_space<vmem>>) attributes {dimension_semantics = [#tpu.dimension_semantics<parallel>, #tpu.dimension_semantics<arbitrary>], iteration_bounds = array<i64: 1, 1>, scalar_prefetch = 0 : i64, scratch_operands = 1 : i64, tpu.core_type = #tpu.core_type<tc>, window_params = [{transform_indices = @transform_0, window_bounds = array<i64: 16, 32>}, {transform_indices = @transform_1, window_bounds = array<i64: 32, 32>}, {pipeline_mode = #tpu.pipeline_mode<synchronous>, transform_indices = @transform_2, window_bounds = array<i64: 1, 32>}, {transform_indices = @transform_3, window_bounds = array<i64: 16, 32>}]} {
    %c0_i32 = arith.constant 0 : i32
    %0 = arith.cmpi eq, %arg1, %c0_i32 : i32
    %1 = arith.extui %0 : i1 to i32
    %c0_i32_0 = arith.constant 0 : i32
    %2 = arith.cmpi ne, %1, %c0_i32_0 : i32
    scf.if %2 {
      %cst_10 = arith.constant 0.000000e+00 : f32
      %12 = vector.broadcast %cst_10 : f32 to vector<16x32xf32>
      %c0_11 = arith.constant 0 : index
      %c0_12 = arith.constant 0 : index
      %13 = vector.load %arg6[%c0_11, %c0_12] : memref<16x32xf32, #tpu.memory_space<vmem>>, vector<16x32xf32>
      tpu.vector_store %arg6[%c0_11, %c0_12], %12 {strides = array<i32>} : memref<16x32xf32, #tpu.memory_space<vmem>>, vector<16x32xf32>,
    } else {
    }
    %c0 = arith.constant 0 : index
    %c0_1 = arith.constant 0 : index
    %3 = vector.load %arg6[%c0, %c0_1] : memref<16x32xf32, #tpu.memory_space<vmem>>, vector<16x32xf32>
    %c0_2 = arith.constant 0 : index
    %c0_3 = arith.constant 0 : index
    %4 = vector.load %arg2[%c0_2, %c0_3] : memref<16x32xf32, #tpu.memory_space<vmem>>, vector<16x32xf32>
    %c0_4 = arith.constant 0 : index
    %c0_5 = arith.constant 0 : index
    %5 = vector.load %arg3[%c0_4, %c0_5] : memref<32x32xf32, #tpu.memory_space<vmem>>, vector<32x32xf32>
    %cst = arith.constant dense<0.000000e+00> : vector<16x32xf32>
    %6 = tpu.matmul %4, %5, %cst {dimension_numbers = #tpu.dot_dimension_numbers<[1], [0], [0], [1], [0, 0, 1, 1], [], []>} : vector<16x32xf32>, vector<32x32xf32>, vector<16x32xf32> -> vector<16x32xf32>
    %7 = arith.addf %3, %6 : vector<16x32xf32>
    %c0_6 = arith.constant 0 : index
    %c0_7 = arith.constant 0 : index
    %8 = vector.load %arg6[%c0_6, %c0_7] : memref<16x32xf32, #tpu.memory_space<vmem>>, vector<16x32xf32>
    tpu.vector_store %arg6[%c0_6, %c0_7], %7 {strides = array<i32>} : memref<16x32xf32, #tpu.memory_space<vmem>>, vector<16x32xf32>,
    %c0_i32_8 = arith.constant 0 : i32
    %9 = arith.cmpi eq, %arg1, %c0_i32_8 : i32
    %10 = arith.extui %9 : i1 to i32
    %c0_i32_9 = arith.constant 0 : i32
    %11 = arith.cmpi ne, %10, %c0_i32_9 : i32
    scf.if %11 {
      %c0_10 = arith.constant 0 : index
      %c0_11 = arith.constant 0 : index
      %12 = vector.load %arg6[%c0_10, %c0_11] : memref<16x32xf32, #tpu.memory_space<vmem>>, vector<16x32xf32>
      %c0_12 = arith.constant 0 : index
      %c0_13 = arith.constant 0 : index
      %13 = vector.load %arg4[%c0_12, %c0_13] : memref<1x32xf32, #tpu.memory_space<vmem>>, vector<1x32xf32>
      %14 = vector.broadcast %13 : vector<1x32xf32> to vector<16x32xf32>
      %15 = arith.addf %12, %14 : vector<16x32xf32>
      %c0_14 = arith.constant 0 : index
      %c0_15 = arith.constant 0 : index
      %16 = vector.load %arg5[%c0_14, %c0_15] : memref<16x32xf32, #tpu.memory_space<vmem>>, vector<16x32xf32>
      tpu.vector_store %arg5[%c0_14, %c0_15], %15 {strides = array<i32>} : memref<16x32xf32, #tpu.memory_space<vmem>>, vector<16x32xf32>,
    } else {
    }
    return
  }
  func.func @transform_0(%arg0: i32, %arg1: i32) -> (i32, i32) {
    %c0_i32 = arith.constant 0 : i32
    return %arg0, %arg1 : i32, i32
  }
  func.func @transform_1(%arg0: i32, %arg1: i32) -> (i32, i32) {
    %c0_i32 = arith.constant 0 : i32
    %c0_i32_0 = arith.constant 0 : i32
    return %arg1, %c0_i32 : i32, i32
  }
  func.func @transform_2(%arg0: i32, %arg1: i32) -> (i32, i32) {
    %c0_i32 = arith.constant 0 : i32
    %c0_i32_0 = arith.constant 0 : i32
    %c0_i32_1 = arith.constant 0 : i32
    return %c0_i32, %c0_i32_0 : i32, i32
  }
  func.func @transform_3(%arg0: i32, %arg1: i32) -> (i32, i32) {
    %c0_i32 = arith.constant 0 : i32
    %c0_i32_0 = arith.constant 0 : i32
    return %arg0, %c0_i32 : i32, i32
  }
}

</mosaic_0001>

<llo_original>
// kernel: multi_headed_attention.9
$region0: #{multi_headed_attention.9}
  #allocation0 [shape = 'u32[]', space=smem, size = 0x4, offset = 0x4, fixed_abs, tag = 'smem constant byte address 0x4 - core index']
  #allocation1 [shape = 'u32[72,128]{1,0:T(1,128)}', space=vmem, size = 0x9000, scoped, tag = 'internal scratch']
  #allocation2 [shape = 'f32[16,32]{1,0:T(8,128)}', space=vmem, size = 0x2000, scoped, tag = 'scratch operand']
  %s0 = inlined_call_operand.vmem [shape: f32[16,32], index: 0, kind: input, shape index: {}]
  %s1 = inlined_call_operand.hbm [shape: f32[32,32], index: 1, kind: input, shape index: {}]
  %s2 = inlined_call_operand.vmem [shape: f32[1,32], index: 2, kind: input, shape index: {}]
  %s3 = inlined_call_operand.hbm [shape: f32[16,32], index: 3, kind: output, shape index: {}]
  %s4 = sld [smem:[#allocation0]]
  $region34: #{multi_headed_attention.9} parent=0
    _
  %s6 = ssub.s32 1, %s4
  %s7 = scalar_select 0, %s6, %s4
  $region1: #{multi_headed_attention.9} parent=0
    #allocation3 [shape = 'u8[16384]{0}', space=vmem, size = 0x4000, scoped, tag = 'input window, operand 1, single buffered']
    #allocation4 [shape = 's32[1]{0}', space=sflag, size = 0x4, scoped, tag = 'scoped memory for multi_headed_attention.9']
    #allocation5 [shape = 's32[1]{0}', space=sflag, size = 0x4, scoped, tag = 'scoped memory for multi_headed_attention.9']
    #allocation6 [shape = 'u8[8192]{0}', space=vmem, size = 0x2000, scoped, tag = 'output window, operand 0, single buffered']
    %8 = vsyncpa [#allocation4], 0
    %9 = vsyncpa [#allocation5], 0
    // Predicated region
    $region2: #{multi_headed_attention.9} parent=1 // pred_check
      _
    $region3: #{multi_headed_attention.9} parent=1 // pred_check_branch
      %11 = sbr.rel (0) target = $region5
    $region4: #{multi_headed_attention.9} parent=1 // pred_region
      _
    $region5: #{multi_headed_attention.9} parent=1 // pred_fallthru
      _
    // Predicated region
    $region6: #{multi_headed_attention.9} parent=1 // pred_check
      _
    $region7: #{multi_headed_attention.9} parent=1 // pred_check_branch
      %13 = sbr.rel (0) target = $region9
    $region8: #{multi_headed_attention.9} parent=1 // pred_region
      %15 = vsyncadd [#allocation4], 0
      %s16 = sshll.u32 %s1, 4
      %s17 = int_to_ptr.hbm [resolvable:$true] %s16
      %s18 = sshll.u32 [#allocation3], 4
      %s19 = int_to_ptr.vmem [resolvable:$true] %s18
      %24 = dma.hbm_to_vmem [thread:$0]  %s17, 512, %s19, [#allocation4], 128, 128, 8
    $region9: #{multi_headed_attention.9} parent=1 // pred_fallthru
      _
    // Predicated region
    $region10: #{multi_headed_attention.9} parent=1 // pred_check
      _
    $region11: #{multi_headed_attention.9} parent=1 // pred_check_branch
      %26 = sbr.rel (0) target = $region13
    $region12: #{multi_headed_attention.9} parent=1 // pred_region
      _
    $region13: #{multi_headed_attention.9} parent=1 // pred_fallthru
      _
    // Predicated region
    $region14: #{multi_headed_attention.9} parent=1 // pred_check
      _
    $region15: #{multi_headed_attention.9} parent=1 // pred_check_branch
      %28 = sbr.rel (0) target = $region17
    $region16: #{multi_headed_attention.9} parent=1 // pred_region
      %30 = dma.done [#allocation4], 512
    $region17: #{multi_headed_attention.9} parent=1 // pred_fallthru
      _
    %p31 = scmp.eq.s32.totalorder 0, 0
    // Predicated region
    $region18: #{multi_headed_attention.9} parent=1 // pred_check
      %p32 = pneg %p31
    $region19: #{multi_headed_attention.9} parent=1 // pred_check_branch
      %34 = sbr.rel (%p32) target = $region21
    $region20: #{multi_headed_attention.9} parent=1 // pred_region
      %vm35 = vcmask 261120
      %36 = vst.msk [vmem:[#allocation2] sm:$0xff] %vm35, 0.0
      %37 = vst.msk [vmem:[#allocation2 + $0x8] sm:$0xff] %vm35, 0.0
    $region21: #{multi_headed_attention.9} parent=1 // pred_fallthru
      _
    %v38 = vld [vmem:[#allocation2] sm:$0xff]
    %v39 = vld [vmem:[#allocation2 + $0x8] sm:$0xff]
    %v40 = vld [vmem:[%s0] sm:$0xff]
    %v41 = vld [vmem:[%s0 + $0x8] sm:$0xff]
    %v42 = vld [vmem:[#allocation3] sm:$0xff]
    %v43 = vld [vmem:[#allocation3 + $0x8] sm:$0xff]
    %v44 = vld [vmem:[#allocation3 + $0x10] sm:$0xff]
    %v45 = vld [vmem:[#allocation3 + $0x18] sm:$0xff]
    %vm46 = vcmask 261120
    %v48 = vsel %vm46, %v40, 0
    %v51 = vsel %vm46, %v41, 0
    %53 = vmatpush.msra.mxu0 0.0
    %54 = vmatpush.msra.mxu0 0.0
    %55 = vmatpush.msra.mxu0 0.0
    %56 = vmatpush.msra.mxu0 0.0
    %57 = vmatpush.msra.mxu0 0.0
    %58 = vmatpush.msra.mxu0 0.0
    %59 = vmatpush.msra.mxu0 0.0
    %60 = vmatpush.msra.mxu0 0.0
    %61 = vmatpush.msra.mxu0 0.0
    %62 = vmatpush.msra.mxu0 0.0
    %63 = vmatpush.msra.mxu0 0.0
    %64 = vmatpush.msra.mxu0 0.0
    %65 = vmatpush.msra.mxu0 %v45
    %66 = vmatpush.msra.mxu0 %v44
    %67 = vmatpush.msra.mxu0 %v43
    %68 = vmatpush.msra.mxu0 %v42
    %69 = vmatmul.f32.gmra.mxu0 %v48
    %v70 = vpop.f32.mrf.mxu0
    %v71 = vadd.f32 0.0, %v70
    %72 = vmatmul.f32.gmra.mxu0 %v51
    %v73 = vpop.f32.mrf.mxu0
    %v74 = vadd.f32 0.0, %v73
    %75 = vdwg.mxu0
    %v76 = vadd.f32 %v38, %v71
    %v77 = vadd.f32 %v39, %v74
    %78 = vst.msk [vmem:[#allocation2] sm:$0xff] %vm46, %v76
    %79 = vst.msk [vmem:[#allocation2 + $0x8] sm:$0xff] %vm46, %v77
    // Predicated region
    $region22: #{multi_headed_attention.9} parent=1 // pred_check
      %p80 = pneg %p31
    $region23: #{multi_headed_attention.9} parent=1 // pred_check_branch
      %82 = sbr.rel (%p80) target = $region25
    $region24: #{multi_headed_attention.9} parent=1 // pred_region
      %v83 = vld [vmem:[#allocation2] sm:$0xff]
      %v84 = vld [vmem:[#allocation2 + $0x8] sm:$0xff]
      %v85 = vld [vmem:[%s2] sm:$0x1]
      %v87 = vperm.slane %v85, 0
      %v89 = vadd.f32 %v83, %v87
      %v90 = vadd.f32 %v84, %v87
      %91 = vst.msk [vmem:[#allocation6] sm:$0xff] %vm46, %v89
      %92 = vst.msk [vmem:[#allocation6 + $0x8] sm:$0xff] %vm46, %v90
    $region25: #{multi_headed_attention.9} parent=1 // pred_fallthru
      _
    // Predicated region
    $region26: #{multi_headed_attention.9} parent=1 // pred_check
      _
    $region27: #{multi_headed_attention.9} parent=1 // pred_check_branch
      %94 = sbr.rel (0) target = $region29
    $region28: #{multi_headed_attention.9} parent=1 // pred_region
      %96 = vsyncadd [#allocation5], 0
      %s97 = sshll.u32 [#allocation6], 4
      %s98 = int_to_ptr.vmem [resolvable:$true] %s97
      %s99 = sshll.u32 %s3, 4
      %s100 = int_to_ptr.hbm [resolvable:$true] %s99
      %105 = dma.vmem_to_hbm [thread:$0]  %s98, 256, %s100, [#allocation5], 128, 128, 8
    $region29: #{multi_headed_attention.9} parent=1 // pred_fallthru
      _
    // Predicated region
    $region30: #{multi_headed_attention.9} parent=1 // pred_check
      _
    $region31: #{multi_headed_attention.9} parent=1 // pred_check_branch
      %107 = sbr.rel (0) target = $region33
    $region32: #{multi_headed_attention.9} parent=1 // pred_region
      %109 = dma.done [#allocation5], 256
    $region33: #{multi_headed_attention.9} parent=1 // pred_fallthru
      _
    %110 = vsyncpa [#allocation4], 1
    %111 = vsyncpa [#allocation5], 1

// kernel: multi_headed_attention.6
$region0: #{multi_headed_attention.6}
  #allocation0 [shape = 'u32[]', space=smem, size = 0x4, offset = 0x4, fixed_abs, tag = 'smem constant byte address 0x4 - core index']
  #allocation1 [shape = 'u32[72,128]{1,0:T(1,128)}', space=vmem, size = 0x9000, scoped, tag = 'internal scratch']
  #allocation2 [shape = 'f32[16,32]{1,0:T(8,128)}', space=vmem, size = 0x2000, scoped, tag = 'scratch operand']
  %s0 = inlined_call_operand.hbm [shape: f32[16,32], index: 0, kind: input, shape index: {}]
  %s1 = inlined_call_operand.hbm [shape: f32[32,32], index: 1, kind: input, shape index: {}]
  %s2 = inlined_call_operand.hbm [shape: f32[1,32], index: 2, kind: input, shape index: {}]
  %s3 = inlined_call_operand.vmem [shape: f32[16,32], index: 3, kind: output, shape index: {}]
  %s4 = sld [smem:[#allocation0]]
  $region42: #{multi_headed_attention.6} parent=0
    _
  %s6 = ssub.s32 1, %s4
  %s7 = scalar_select 0, %s6, %s4
  $region1: #{multi_headed_attention.6} parent=0
    #allocation3 [shape = 'u8[8192]{0}', space=vmem, size = 0x2000, scoped, tag = 'input window, operand 0, single buffered']
    #allocation4 [shape = 's32[1]{0}', space=sflag, size = 0x4, scoped, tag = 'scoped memory for multi_headed_attention.6']
    #allocation5 [shape = 'u8[16384]{0}', space=vmem, size = 0x4000, scoped, tag = 'input window, operand 1, single buffered']
    #allocation6 [shape = 's32[1]{0}', space=sflag, size = 0x4, scoped, tag = 'scoped memory for multi_headed_attention.6']
    #allocation7 [shape = 'u8[512]{0}', space=vmem, size = 0x400, scoped, tag = 'input window, operand 2, single buffered']
    %8 = vsyncpa [#allocation4], 0
    %9 = vsyncpa [#allocation6], 0
    // Predicated region
    $region2: #{multi_headed_attention.6} parent=1 // pred_check
      _
    $region3: #{multi_headed_attention.6} parent=1 // pred_check_branch
      %11 = sbr.rel (0) target = $region5
    $region4: #{multi_headed_attention.6} parent=1 // pred_region
      %13 = vsyncadd [#allocation4], 0
      %s14 = sshll.u32 %s0, 4
      %s15 = int_to_ptr.hbm [resolvable:$true] %s14
      %s16 = sshll.u32 [#allocation3], 4
      %s17 = int_to_ptr.vmem [resolvable:$true] %s16
      %22 = dma.hbm_to_vmem [thread:$0]  %s15, 256, %s17, [#allocation4], 128, 128, 8
    $region5: #{multi_headed_attention.6} parent=1 // pred_fallthru
      _
    // Predicated region
    $region6: #{multi_headed_attention.6} parent=1 // pred_check
      _
    $region7: #{multi_headed_attention.6} parent=1 // pred_check_branch
      %24 = sbr.rel (0) target = $region9
    $region8: #{multi_headed_attention.6} parent=1 // pred_region
      %26 = vsyncadd [#allocation6], 0
      %s27 = sshll.u32 %s1, 4
      %s28 = int_to_ptr.hbm [resolvable:$true] %s27
      %s29 = sshll.u32 [#allocation5], 4
      %s30 = int_to_ptr.vmem [resolvable:$true] %s29
      %35 = dma.hbm_to_vmem [thread:$0]  %s28, 512, %s30, [#allocation6], 128, 128, 8
    $region9: #{multi_headed_attention.6} parent=1 // pred_fallthru
      _
    // Predicated region
    $region10: #{multi_headed_attention.6} parent=1 // pred_check
      _
    $region11: #{multi_headed_attention.6} parent=1 // pred_check_branch
      %37 = sbr.rel (0) target = $region13
    $region12: #{multi_headed_attention.6} parent=1 // pred_region
      %39 = vsyncadd [#allocation6], 0
      %s41 = sshll.u32 %s2, 4
      %s42 = int_to_ptr.hbm [resolvable:$true] %s41
      %s43 = sshll.u32 [#allocation7], 4
      %s44 = int_to_ptr.vmem [resolvable:$true] %s43
      %46 = dma.hbm_to_vmem [thread:$0]  %s42, 16, %s44, [#allocation6]
    $region13: #{multi_headed_attention.6} parent=1 // pred_fallthru
      _
    // Predicated region
    $region14: #{multi_headed_attention.6} parent=1 // pred_check
      _
    $region15: #{multi_headed_attention.6} parent=1 // pred_check_branch
      %48 = sbr.rel (0) target = $region17
    $region16: #{multi_headed_attention.6} parent=1 // pred_region
      %50 = dma.done [#allocation4], 256
    $region17: #{multi_headed_attention.6} parent=1 // pred_fallthru
      _
    // Predicated region
    $region18: #{multi_headed_attention.6} parent=1 // pred_check
      _
    $region19: #{multi_headed_attention.6} parent=1 // pred_check_branch
      %52 = sbr.rel (0) target = $region21
    $region20: #{multi_headed_attention.6} parent=1 // pred_region
      %54 = dma.done [#allocation6], 512
    $region21: #{multi_headed_attention.6} parent=1 // pred_fallthru
      _
    // Predicated region
    $region22: #{multi_headed_attention.6} parent=1 // pred_check
      _
    $region23: #{multi_headed_attention.6} parent=1 // pred_check_branch
      %56 = sbr.rel (0) target = $region25
    $region24: #{multi_headed_attention.6} parent=1 // pred_region
      %58 = dma.done [#allocation6], 16
    $region25: #{multi_headed_attention.6} parent=1 // pred_fallthru
      _
    %p59 = scmp.eq.s32.totalorder 0, 0
    // Predicated region
    $region26: #{multi_headed_attention.6} parent=1 // pred_check
      %p60 = pneg %p59
    $region27: #{multi_headed_attention.6} parent=1 // pred_check_branch
      %62 = sbr.rel (%p60) target = $region29
    $region28: #{multi_headed_attention.6} parent=1 // pred_region
      %vm63 = vcmask 261120
      %64 = vst.msk [vmem:[#allocation2] sm:$0xff] %vm63, 0.0
      %65 = vst.msk [vmem:[#allocation2 + $0x8] sm:$0xff] %vm63, 0.0
    $region29: #{multi_headed_attention.6} parent=1 // pred_fallthru
      _
    %v66 = vld [vmem:[#allocation2] sm:$0xff]
    %v67 = vld [vmem:[#allocation2 + $0x8] sm:$0xff]
    %v68 = vld [vmem:[#allocation3] sm:$0xff]
    %v69 = vld [vmem:[#allocation3 + $0x8] sm:$0xff]
    %v70 = vld [vmem:[#allocation5] sm:$0xff]
    %v71 = vld [vmem:[#allocation5 + $0x8] sm:$0xff]
    %v72 = vld [vmem:[#allocation5 + $0x10] sm:$0xff]
    %v73 = vld [vmem:[#allocation5 + $0x18] sm:$0xff]
    %vm74 = vcmask 261120
    %v76 = vsel %vm74, %v68, 0
    %v79 = vsel %vm74, %v69, 0
    %81 = vmatpush.msra.mxu0 0.0
    %82 = vmatpush.msra.mxu0 0.0
    %83 = vmatpush.msra.mxu0 0.0
    %84 = vmatpush.msra.mxu0 0.0
    %85 = vmatpush.msra.mxu0 0.0
    %86 = vmatpush.msra.mxu0 0.0
    %87 = vmatpush.msra.mxu0 0.0
    %88 = vmatpush.msra.mxu0 0.0
    %89 = vmatpush.msra.mxu0 0.0
    %90 = vmatpush.msra.mxu0 0.0
    %91 = vmatpush.msra.mxu0 0.0
    %92 = vmatpush.msra.mxu0 0.0
    %93 = vmatpush.msra.mxu0 %v73
    %94 = vmatpush.msra.mxu0 %v72
    %95 = vmatpush.msra.mxu0 %v71
    %96 = vmatpush.msra.mxu0 %v70
    %97 = vmatmul.f32.gmra.mxu0 %v76
    %v98 = vpop.f32.mrf.mxu0
    %v99 = vadd.f32 0.0, %v98
    %100 = vmatmul.f32.gmra.mxu0 %v79
    %v101 = vpop.f32.mrf.mxu0
    %v102 = vadd.f32 0.0, %v101
    %103 = vdwg.mxu0
    %v104 = vadd.f32 %v66, %v99
    %v105 = vadd.f32 %v67, %v102
    %106 = vst.msk [vmem:[#allocation2] sm:$0xff] %vm74, %v104
    %107 = vst.msk [vmem:[#allocation2 + $0x8] sm:$0xff] %vm74, %v105
    // Predicated region
    $region30: #{multi_headed_attention.6} parent=1 // pred_check
      %p108 = pneg %p59
    $region31: #{multi_headed_attention.6} parent=1 // pred_check_branch
      %110 = sbr.rel (%p108) target = $region33
    $region32: #{multi_headed_attention.6} parent=1 // pred_region
      %v111 = vld [vmem:[#allocation2] sm:$0xff]
      %v112 = vld [vmem:[#allocation2 + $0x8] sm:$0xff]
      %v113 = vld [vmem:[#allocation7] sm:$0x1]
      %v115 = vperm.slane %v113, 0
      %v117 = vadd.f32 %v111, %v115
      %v118 = vadd.f32 %v112, %v115
      %119 = vst.msk [vmem:[%s3] sm:$0xff] %vm74, %v117
      %120 = vst.msk [vmem:[%s3 + $0x8] sm:$0xff] %vm74, %v118
    $region33: #{multi_headed_attention.6} parent=1 // pred_fallthru
      _
    // Predicated region
    $region34: #{multi_headed_attention.6} parent=1 // pred_check
      _
    $region35: #{multi_headed_attention.6} parent=1 // pred_check_branch
      %122 = sbr.rel (0) target = $region37
    $region36: #{multi_headed_attention.6} parent=1 // pred_region
      _
    $region37: #{multi_headed_attention.6} parent=1 // pred_fallthru
      _
    // Predicated region
    $region38: #{multi_headed_attention.6} parent=1 // pred_check
      _
    $region39: #{multi_headed_attention.6} parent=1 // pred_check_branch
      %124 = sbr.rel (0) target = $region41
    $region40: #{multi_headed_attention.6} parent=1 // pred_region
      _
    $region41: #{multi_headed_attention.6} parent=1 // pred_fallthru
      _
    %125 = vsyncpa [#allocation4], 1
    %126 = vsyncpa [#allocation6], 1

// kernel: multi_headed_attention.7
$region0: #{multi_headed_attention.7}
  #allocation0 [shape = 'u32[]', space=smem, size = 0x4, offset = 0x4, fixed_abs, tag = 'smem constant byte address 0x4 - core index']
  #allocation1 [shape = 'u32[72,128]{1,0:T(1,128)}', space=vmem, size = 0x9000, scoped, tag = 'internal scratch']
  #allocation2 [shape = 'f32[16,32]{1,0:T(8,128)}', space=vmem, size = 0x2000, scoped, tag = 'scratch operand']
  %s0 = inlined_call_operand.vmem [shape: f32[16,32], index: 0, kind: input, shape index: {}]
  %s1 = inlined_call_operand.hbm [shape: f32[32,32], index: 1, kind: input, shape index: {}]
  %s2 = inlined_call_operand.hbm [shape: f32[1,32], index: 2, kind: input, shape index: {}]
  %s3 = inlined_call_operand.vmem [shape: f32[16,32], index: 3, kind: output, shape index: {}]
  %s4 = sld [smem:[#allocation0]]
  $region38: #{multi_headed_attention.7} parent=0
    _
  %s6 = ssub.s32 1, %s4
  %s7 = scalar_select 0, %s6, %s4
  $region1: #{multi_headed_attention.7} parent=0
    #allocation3 [shape = 'u8[16384]{0}', space=vmem, size = 0x4000, scoped, tag = 'input window, operand 1, single buffered']
    #allocation4 [shape = 's32[1]{0}', space=sflag, size = 0x4, scoped, tag = 'scoped memory for multi_headed_attention.7']
    #allocation5 [shape = 'u8[512]{0}', space=vmem, size = 0x400, scoped, tag = 'input window, operand 2, single buffered']
    #allocation6 [shape = 's32[1]{0}', space=sflag, size = 0x4, scoped, tag = 'scoped memory for multi_headed_attention.7']
    %8 = vsyncpa [#allocation4], 0
    %9 = vsyncpa [#allocation6], 0
    // Predicated region
    $region2: #{multi_headed_attention.7} parent=1 // pred_check
      _
    $region3: #{multi_headed_attention.7} parent=1 // pred_check_branch
      %11 = sbr.rel (0) target = $region5
    $region4: #{multi_headed_attention.7} parent=1 // pred_region
      _
    $region5: #{multi_headed_attention.7} parent=1 // pred_fallthru
      _
    // Predicated region
    $region6: #{multi_headed_attention.7} parent=1 // pred_check
      _
    $region7: #{multi_headed_attention.7} parent=1 // pred_check_branch
      %13 = sbr.rel (0) target = $region9
    $region8: #{multi_headed_attention.7} parent=1 // pred_region
      %15 = vsyncadd [#allocation4], 0
      %s16 = sshll.u32 %s1, 4
      %s17 = int_to_ptr.hbm [resolvable:$true] %s16
      %s18 = sshll.u32 [#allocation3], 4
      %s19 = int_to_ptr.vmem [resolvable:$true] %s18
      %24 = dma.hbm_to_vmem [thread:$0]  %s17, 512, %s19, [#allocation4], 128, 128, 8
    $region9: #{multi_headed_attention.7} parent=1 // pred_fallthru
      _
    // Predicated region
    $region10: #{multi_headed_attention.7} parent=1 // pred_check
      _
    $region11: #{multi_headed_attention.7} parent=1 // pred_check_branch
      %26 = sbr.rel (0) target = $region13
    $region12: #{multi_headed_attention.7} parent=1 // pred_region
      %28 = vsyncadd [#allocation6], 0
      %s30 = sshll.u32 %s2, 4
      %s31 = int_to_ptr.hbm [resolvable:$true] %s30
      %s32 = sshll.u32 [#allocation5], 4
      %s33 = int_to_ptr.vmem [resolvable:$true] %s32
      %35 = dma.hbm_to_vmem [thread:$0]  %s31, 16, %s33, [#allocation6]
    $region13: #{multi_headed_attention.7} parent=1 // pred_fallthru
      _
    // Predicated region
    $region14: #{multi_headed_attention.7} parent=1 // pred_check
      _
    $region15: #{multi_headed_attention.7} parent=1 // pred_check_branch
      %37 = sbr.rel (0) target = $region17
    $region16: #{multi_headed_attention.7} parent=1 // pred_region
      %39 = dma.done [#allocation4], 512
    $region17: #{multi_headed_attention.7} parent=1 // pred_fallthru
      _
    // Predicated region
    $region18: #{multi_headed_attention.7} parent=1 // pred_check
      _
    $region19: #{multi_headed_attention.7} parent=1 // pred_check_branch
      %41 = sbr.rel (0) target = $region21
    $region20: #{multi_headed_attention.7} parent=1 // pred_region
      %43 = dma.done [#allocation6], 16
    $region21: #{multi_headed_attention.7} parent=1 // pred_fallthru
      _
    %p44 = scmp.eq.s32.totalorder 0, 0
    // Predicated region
    $region22: #{multi_headed_attention.7} parent=1 // pred_check
      %p45 = pneg %p44
    $region23: #{multi_headed_attention.7} parent=1 // pred_check_branch
      %47 = sbr.rel (%p45) target = $region25
    $region24: #{multi_headed_attention.7} parent=1 // pred_region
      %vm48 = vcmask 261120
      %49 = vst.msk [vmem:[#allocation2] sm:$0xff] %vm48, 0.0
      %50 = vst.msk [vmem:[#allocation2 + $0x8] sm:$0xff] %vm48, 0.0
    $region25: #{multi_headed_attention.7} parent=1 // pred_fallthru
      _
    %v51 = vld [vmem:[#allocation2] sm:$0xff]
    %v52 = vld [vmem:[#allocation2 + $0x8] sm:$0xff]
    %v53 = vld [vmem:[%s0] sm:$0xff]
    %v54 = vld [vmem:[%s0 + $0x8] sm:$0xff]
    %v55 = vld [vmem:[#allocation3] sm:$0xff]
    %v56 = vld [vmem:[#allocation3 + $0x8] sm:$0xff]
    %v57 = vld [vmem:[#allocation3 + $0x10] sm:$0xff]
    %v58 = vld [vmem:[#allocation3 + $0x18] sm:$0xff]
    %vm59 = vcmask 261120
    %v61 = vsel %vm59, %v53, 0
    %v64 = vsel %vm59, %v54, 0
    %66 = vmatpush.msra.mxu0 0.0
    %67 = vmatpush.msra.mxu0 0.0
    %68 = vmatpush.msra.mxu0 0.0
    %69 = vmatpush.msra.mxu0 0.0
    %70 = vmatpush.msra.mxu0 0.0
    %71 = vmatpush.msra.mxu0 0.0
    %72 = vmatpush.msra.mxu0 0.0
    %73 = vmatpush.msra.mxu0 0.0
    %74 = vmatpush.msra.mxu0 0.0
    %75 = vmatpush.msra.mxu0 0.0
    %76 = vmatpush.msra.mxu0 0.0
    %77 = vmatpush.msra.mxu0 0.0
    %78 = vmatpush.msra.mxu0 %v58
    %79 = vmatpush.msra.mxu0 %v57
    %80 = vmatpush.msra.mxu0 %v56
    %81 = vmatpush.msra.mxu0 %v55
    %82 = vmatmul.f32.gmra.mxu0 %v61
    %v83 = vpop.f32.mrf.mxu0
    %v84 = vadd.f32 0.0, %v83
    %85 = vmatmul.f32.gmra.mxu0 %v64
    %v86 = vpop.f32.mrf.mxu0
    %v87 = vadd.f32 0.0, %v86
    %88 = vdwg.mxu0
    %v89 = vadd.f32 %v51, %v84
    %v90 = vadd.f32 %v52, %v87
    %91 = vst.msk [vmem:[#allocation2] sm:$0xff] %vm59, %v89
    %92 = vst.msk [vmem:[#allocation2 + $0x8] sm:$0xff] %vm59, %v90
    // Predicated region
    $region26: #{multi_headed_attention.7} parent=1 // pred_check
      %p93 = pneg %p44
    $region27: #{multi_headed_attention.7} parent=1 // pred_check_branch
      %95 = sbr.rel (%p93) target = $region29
    $region28: #{multi_headed_attention.7} parent=1 // pred_region
      %v96 = vld [vmem:[#allocation2] sm:$0xff]
      %v97 = vld [vmem:[#allocation2 + $0x8] sm:$0xff]
      %v98 = vld [vmem:[#allocation5] sm:$0x1]
      %v100 = vperm.slane %v98, 0
      %v102 = vadd.f32 %v96, %v100
      %v103 = vadd.f32 %v97, %v100
      %104 = vst.msk [vmem:[%s3] sm:$0xff] %vm59, %v102
      %105 = vst.msk [vmem:[%s3 + $0x8] sm:$0xff] %vm59, %v103
    $region29: #{multi_headed_attention.7} parent=1 // pred_fallthru
      _
    // Predicated region
    $region30: #{multi_headed_attention.7} parent=1 // pred_check
      _
    $region31: #{multi_headed_attention.7} parent=1 // pred_check_branch
      %107 = sbr.rel (0) target = $region33
    $region32: #{multi_headed_attention.7} parent=1 // pred_region
      _
    $region33: #{multi_headed_attention.7} parent=1 // pred_fallthru
      _
    // Predicated region
    $region34: #{multi_headed_attention.7} parent=1 // pred_check
      _
    $region35: #{multi_headed_attention.7} parent=1 // pred_check_branch
      %109 = sbr.rel (0) target = $region37
    $region36: #{multi_headed_attention.7} parent=1 // pred_region
      _
    $region37: #{multi_headed_attention.7} parent=1 // pred_fallthru
      _
    %110 = vsyncpa [#allocation4], 1
    %111 = vsyncpa [#allocation6], 1

// kernel: multi_headed_attention.8
$region0: #{multi_headed_attention.8}
  #allocation0 [shape = 'u32[]', space=smem, size = 0x4, offset = 0x4, fixed_abs, tag = 'smem constant byte address 0x4 - core index']
  #allocation1 [shape = 'u32[72,128]{1,0:T(1,128)}', space=vmem, size = 0x9000, scoped, tag = 'internal scratch']
  #allocation2 [shape = 'f32[4,8,1]{2,1,0:T(8,128)}', space=vmem, size = 0x4000, scoped, tag = 'scratch operand']
  #allocation3 [shape = 'f32[4,8,1]{2,1,0:T(8,128)}', space=vmem, size = 0x4000, scoped, tag = 'scratch operand']
  #allocation4 [shape = 'f32[4,8,8]{2,1,0:T(8,128)}', space=vmem, size = 0x4000, scoped, tag = 'scratch operand']
  %s0 = inlined_call_operand.vmem [shape: f32[2,8,32], index: 0, kind: input, shape index: {}]
  %s1 = inlined_call_operand.vmem [shape: f32[2,8,32], index: 1, kind: input, shape index: {}]
  %s2 = inlined_call_operand.vmem [shape: f32[2,8,32], index: 2, kind: input, shape index: {}]
  %s3 = inlined_call_operand.vmem [shape: f32[2,8,32], index: 3, kind: output, shape index: {}]
  %s4 = sld [smem:[#allocation0]]
  $region53: #{multi_headed_attention.8} parent=0
    _
  %s6 = ssub.s32 1, %s4
  %s7 = scalar_select 0, %s6, %s4
  loop: start=0, step=1, limit=4
  $region2: #{multi_headed_attention.8} parent=0 // loop_pre_header
    _
  $region3: #{multi_headed_attention.8} parent=0 // loop_header
    %s9 = sphi 0, %s13
    %p10 = scmp.ge.s32.totalorder %s9, 4
    %s16 = sphi 0, %s35
    %s17 = sphi 0, %s31
    %s18 = sphi 0, %s27
    %s19 = sphi 0, %s16
    %s20 = sphi 0, %s17
    %s21 = sphi 0, %s18
    %s22 = sphi 0, %s19
    %s23 = sphi 0, %s20
    %s24 = sphi 0, %s21
    %s40 = sphi 0, %s42
    %s43 = sphi 0, %s40
    %s44 = sphi 0, %s43
    %s60 = sphi 0, %s44
    %s68 = sphi 0, %s70
    %s71 = sphi 0, %s68
    %s72 = sphi 0, %s71
    %s88 = sphi 0, %s72
    %s96 = sphi 0, %s98
    %s99 = sphi 0, %s96
    %s100 = sphi 0, %s99
    %s116 = sphi 0, %s100
    %s124 = sphi 0, %s126
    %s127 = sphi 0, %s124
    %s128 = sphi 0, %s127
    %s144 = sphi 0, %s128
  $region4: #{multi_headed_attention.8} parent=0 // loop_header_branch
    %12 = sbr.rel (%p10) target = $region8
  $region5: #{multi_headed_attention.8} parent=0 // loop_body
    %s14 = ssub.s32 %s9, 1
    %s15 = ssub.s32 %s9, 2
    %s25 = sadd.s32 1, %s18
    %p26 = scmp.ge.s32.totalorder %s25, 1
    %s27 = scalar_select %p26, 0, %s25
    %s28 = sadd.s32 1, %s17
    %s29 = scalar_select %p26, %s28, %s17
    %p30 = scmp.ge.s32.totalorder %s29, 1
    %s31 = scalar_select %p30, 0, %s29
    %s32 = sadd.s32 1, %s16
    %s33 = scalar_select %p30, %s32, %s16
    %p34 = scmp.ge.s32.totalorder %s33, 2
    %s35 = scalar_select %p34, 0, %s33
    %s36 = ssub.s32 %s16, %s35
    %s37 = ssub.s32 %s17, %s31
    %s38 = sor.u32 %s36, %s37
    %p39 = scmp.eq.s32.totalorder %s38, 0
    %s41 = sadd.s32 %s40, 1
    %s42 = scalar_select %p39, %s40, %s41
    %p45 = pneg %p39
    %p46 = scmp.eq.s32.totalorder %s9, 1
    %p47 = por %p45, %p46
    %p48 = scmp.ne.s32.totalorder %s40, %s43
    %p49 = scmp.eq.s32.totalorder %s9, 0
    %p50 = por %p48, %p49
    %p51 = scmp.ne.s32.totalorder %s40, %s43
    %p52 = scmp.eq.s32.totalorder %s14, 1
    %p53 = por %p51, %p52
    %p54 = scmp.ne.s32.totalorder %s43, %s44
    %p55 = scmp.eq.s32.totalorder %s14, 0
    %p56 = por %p54, %p55
    %p57 = scmp.ne.s32.totalorder %s43, %s44
    %p58 = scmp.eq.s32.totalorder %s15, 1
    %p59 = por %p57, %p58
    %p61 = scmp.ne.s32.totalorder %s44, %s60
    %p62 = scmp.eq.s32.totalorder %s15, 0
    %p63 = por %p61, %p62
    %s64 = ssub.s32 %s16, %s35
    %s65 = ssub.s32 %s18, %s27
    %s66 = sor.u32 %s64, %s65
    %p67 = scmp.eq.s32.totalorder %s66, 0
    %s69 = sadd.s32 %s68, 1
    %s70 = scalar_select %p67, %s68, %s69
    %p73 = pneg %p67
    %p74 = scmp.eq.s32.totalorder %s9, 1
    %p75 = por %p73, %p74
    %p76 = scmp.ne.s32.totalorder %s68, %s71
    %p77 = scmp.eq.s32.totalorder %s9, 0
    %p78 = por %p76, %p77
    %p79 = scmp.ne.s32.totalorder %s68, %s71
    %p80 = scmp.eq.s32.totalorder %s14, 1
    %p81 = por %p79, %p80
    %p82 = scmp.ne.s32.totalorder %s71, %s72
    %p83 = scmp.eq.s32.totalorder %s14, 0
    %p84 = por %p82, %p83
    %p85 = scmp.ne.s32.totalorder %s71, %s72
    %p86 = scmp.eq.s32.totalorder %s15, 1
    %p87 = por %p85, %p86
    %p89 = scmp.ne.s32.totalorder %s72, %s88
    %p90 = scmp.eq.s32.totalorder %s15, 0
    %p91 = por %p89, %p90
    %s92 = ssub.s32 %s16, %s35
    %s93 = ssub.s32 %s18, %s27
    %s94 = sor.u32 %s92, %s93
    %p95 = scmp.eq.s32.totalorder %s94, 0
    %s97 = sadd.s32 %s96, 1
    %s98 = scalar_select %p95, %s96, %s97
    %p101 = pneg %p95
    %p102 = scmp.eq.s32.totalorder %s9, 1
    %p103 = por %p101, %p102
    %p104 = scmp.ne.s32.totalorder %s96, %s99
    %p105 = scmp.eq.s32.totalorder %s9, 0
    %p106 = por %p104, %p105
    %p107 = scmp.ne.s32.totalorder %s96, %s99
    %p108 = scmp.eq.s32.totalorder %s14, 1
    %p109 = por %p107, %p108
    %p110 = scmp.ne.s32.totalorder %s99, %s100
    %p111 = scmp.eq.s32.totalorder %s14, 0
    %p112 = por %p110, %p111
    %p113 = scmp.ne.s32.totalorder %s99, %s100
    %p114 = scmp.eq.s32.totalorder %s15, 1
    %p115 = por %p113, %p114
    %p117 = scmp.ne.s32.totalorder %s100, %s116
    %p118 = scmp.eq.s32.totalorder %s15, 0
    %p119 = por %p117, %p118
    %s120 = ssub.s32 %s16, %s35
    %s121 = ssub.s32 %s17, %s31
    %s122 = sor.u32 %s120, %s121
    %p123 = scmp.eq.s32.totalorder %s122, 0
    %s125 = sadd.s32 %s124, 1
    %s126 = scalar_select %p123, %s124, %s125
    %p129 = pneg %p123
    %p130 = scmp.eq.s32.totalorder %s9, 1
    %p131 = por %p129, %p130
    %p132 = scmp.ne.s32.totalorder %s124, %s127
    %p133 = scmp.eq.s32.totalorder %s9, 0
    %p134 = por %p132, %p133
    %p135 = scmp.ne.s32.totalorder %s124, %s127
    %p136 = scmp.eq.s32.totalorder %s14, 1
    %p137 = por %p135, %p136
    %p138 = scmp.ne.s32.totalorder %s127, %s128
    %p139 = scmp.eq.s32.totalorder %s14, 0
    %p140 = por %p138, %p139
    %p141 = scmp.ne.s32.totalorder %s127, %s128
    %p142 = scmp.eq.s32.totalorder %s15, 1
    %p143 = por %p141, %p142
    %p145 = scmp.ne.s32.totalorder %s128, %s144
    %p146 = scmp.eq.s32.totalorder %s15, 0
    %p147 = por %p145, %p146
    %p148 = scmp.le.s32.totalorder 1, %s9
    %p149 = scmp.lt.s32.totalorder %s9, 3
    %p150 = pnand %p148, %p149
    %p151 = pneg %p150
    // Predicated region
    $region9: #{multi_headed_attention.8} parent=5 // pred_check
      _
    $region10: #{multi_headed_attention.8} parent=5 // pred_check_branch
      %153 = sbr.rel (%p150) target = $region12
    $region11: #{multi_headed_attention.8} parent=5 // pred_region
      %s154 = ssub.s32 %s9, 1
    $region12: #{multi_headed_attention.8} parent=5 // pred_fallthru
      _
    %p155 = scmp.lt.s32.totalorder %s9, 2
    // Predicated region
    $region13: #{multi_headed_attention.8} parent=5 // pred_check
      %p156 = pneg %p155
    $region14: #{multi_headed_attention.8} parent=5 // pred_check_branch
      %158 = sbr.rel (%p156) target = $region16
    $region15: #{multi_headed_attention.8} parent=5 // pred_region
      // Predicated region
      $region17: #{multi_headed_attention.8} parent=15 // pred_check
        %p159 = pneg %p50
      $region18: #{multi_headed_attention.8} parent=15 // pred_check_branch
        %161 = sbr.rel (%p159) target = $region20
      $region19: #{multi_headed_attention.8} parent=15 // pred_region
        %p162 = scmp.lt.s32.totalorder %s16, 1
        %s163 = scalar_select %p162, %s16, 1
        %p164 = scmp.lt.s32.totalorder %s17, 0
        %s165 = scalar_select %p164, %s17, 0
        %s166 = sadd.s32 %s165, %s163
        %s167 = smul.addr %s166, 8
        %s168 = scalar_lea.vmem %s0, %s167
      $region20: #{multi_headed_attention.8} parent=15 // pred_fallthru
        _
      // Predicated region
      $region21: #{multi_headed_attention.8} parent=15 // pred_check
        %p169 = pneg %p78
      $region22: #{multi_headed_attention.8} parent=15 // pred_check_branch
        %171 = sbr.rel (%p169) target = $region24
      $region23: #{multi_headed_attention.8} parent=15 // pred_region
        %p172 = scmp.lt.s32.totalorder %s16, 1
        %s173 = scalar_select %p172, %s16, 1
        %p174 = scmp.lt.s32.totalorder %s18, 0
        %s175 = scalar_select %p174, %s18, 0
        %s176 = sadd.s32 %s175, %s173
        %s177 = smul.addr %s176, 8
        %s178 = scalar_lea.vmem %s1, %s177
      $region24: #{multi_headed_attention.8} parent=15 // pred_fallthru
        _
      // Predicated region
      $region25: #{multi_headed_attention.8} parent=15 // pred_check
        %p179 = pneg %p106
      $region26: #{multi_headed_attention.8} parent=15 // pred_check_branch
        %181 = sbr.rel (%p179) target = $region28
      $region27: #{multi_headed_attention.8} parent=15 // pred_region
        %p182 = scmp.lt.s32.totalorder %s16, 1
        %s183 = scalar_select %p182, %s16, 1
        %p184 = scmp.lt.s32.totalorder %s18, 0
        %s185 = scalar_select %p184, %s18, 0
        %s186 = sadd.s32 %s185, %s183
        %s187 = smul.addr %s186, 8
        %s188 = scalar_lea.vmem %s2, %s187
      $region28: #{multi_headed_attention.8} parent=15 // pred_fallthru
        _
    $region16: #{multi_headed_attention.8} parent=5 // pred_fallthru
      _
    %p189 = scmp.le.s32.totalorder 1, %s9
    %p190 = scmp.lt.s32.totalorder %s9, 3
    %p191 = pnand %p189, %p190
    %p192 = pneg %p191
    // Predicated region
    $region29: #{multi_headed_attention.8} parent=5 // pred_check
      _
    $region30: #{multi_headed_attention.8} parent=5 // pred_check_branch
      %194 = sbr.rel (%p191) target = $region32
    $region31: #{multi_headed_attention.8} parent=5 // pred_region
      %s195 = ssub.s32 %s9, 1
      %p196 = scmp.lt.s32.totalorder %s19, 1
      %s197 = scalar_select %p196, %s19, 1
      %p198 = scmp.lt.s32.totalorder %s20, 0
      %s199 = scalar_select %p198, %s20, 0
      %s200 = sadd.s32 %s199, %s197
      %s201 = smul.addr %s200, 8
      %s202 = scalar_lea.vmem %s0, %s201
      %p203 = pneg %p56
      %p204 = pneg %p53
      %p205 = scmp.lt.s32.totalorder %s19, 1
      %s206 = scalar_select %p205, %s19, 1
      %p207 = scmp.lt.s32.totalorder %s21, 0
      %s208 = scalar_select %p207, %s21, 0
      %s209 = sadd.s32 %s208, %s206
      %s210 = smul.addr %s209, 8
      %s211 = scalar_lea.vmem %s1, %s210
      %p212 = pneg %p84
      %p213 = pneg %p81
      %p214 = scmp.lt.s32.totalorder %s19, 1
      %s215 = scalar_select %p214, %s19, 1
      %p216 = scmp.lt.s32.totalorder %s21, 0
      %s217 = scalar_select %p216, %s21, 0
      %s218 = sadd.s32 %s217, %s215
      %s219 = smul.addr %s218, 8
      %s220 = scalar_lea.vmem %s2, %s219
      %p221 = pneg %p112
      %p222 = pneg %p109
      %p223 = pneg %p140
      %p224 = pneg %p137
      %p225 = scmp.lt.s32.totalorder %s19, 1
      %s226 = scalar_select %p225, %s19, 1
      %p227 = scmp.lt.s32.totalorder %s20, 0
      %s228 = scalar_select %p227, %s20, 0
      %s229 = sadd.s32 %s228, %s226
      %s230 = smul.addr %s229, 8
      %s231 = scalar_lea.vmem %s3, %s230
      %p232 = scmp.lt.s32.totalorder %s19, 1
      %s233 = scalar_select %p232, %s19, 1
      %p234 = scmp.lt.s32.totalorder %s20, 0
      %s235 = scalar_select %p234, %s20, 0
      %s236 = sadd.s32 %s235, %s233
      %s237 = smul.addr %s236, 8
      %s238 = scalar_lea.vmem %s0, %s237
      %p239 = scmp.lt.s32.totalorder %s19, 1
      %s240 = scalar_select %p239, %s19, 1
      %p241 = scmp.lt.s32.totalorder %s21, 0
      %s242 = scalar_select %p241, %s21, 0
      %s243 = sadd.s32 %s242, %s240
      %s244 = smul.addr %s243, 8
      %s245 = scalar_lea.vmem %s1, %s244
      %p246 = scmp.lt.s32.totalorder %s19, 1
      %s247 = scalar_select %p246, %s19, 1
      %p248 = scmp.lt.s32.totalorder %s21, 0
      %s249 = scalar_select %p248, %s21, 0
      %s250 = sadd.s32 %s249, %s247
      %s251 = smul.addr %s250, 8
      %s252 = scalar_lea.vmem %s2, %s251
      %p253 = scmp.lt.s32.totalorder %s19, 1
      %s254 = scalar_select %p253, %s19, 1
      %p255 = scmp.lt.s32.totalorder %s20, 0
      %s256 = scalar_select %p255, %s20, 0
      %s257 = sadd.s32 %s256, %s254
      %s258 = smul.addr %s257, 8
      %s259 = scalar_lea.vmem %s3, %s258
      %p260 = scmp.eq.s32.totalorder %s21, 0
      // Predicated region
      $region33: #{multi_headed_attention.8} parent=31 // pred_check
        %p261 = pneg %p260
      $region34: #{multi_headed_attention.8} parent=31 // pred_check_branch
        %263 = sbr.rel (%p261) target = $region36
      $region35: #{multi_headed_attention.8} parent=31 // pred_region
        %vm264 = vcmask 7168
        %265 = vst.msk [vmem:[#allocation2] sm:$0xff] %vm264, -inf
        %266 = vst.msk [vmem:[#allocation2 + $0x8] sm:$0xff] %vm264, -inf
        %267 = vst.msk [vmem:[#allocation2 + $0x10] sm:$0xff] %vm264, -inf
        %268 = vst.msk [vmem:[#allocation2 + $0x18] sm:$0xff] %vm264, -inf
        %269 = vst.msk [vmem:[#allocation3] sm:$0xff] %vm264, 0.0
        %270 = vst.msk [vmem:[#allocation3 + $0x8] sm:$0xff] %vm264, 0.0
        %271 = vst.msk [vmem:[#allocation3 + $0x10] sm:$0xff] %vm264, 0.0
        %272 = vst.msk [vmem:[#allocation3 + $0x18] sm:$0xff] %vm264, 0.0
        %vm273 = vcmask 64512
        %274 = vst.msk [vmem:[#allocation4] sm:$0xff] %vm273, 0.0
        %275 = vst.msk [vmem:[#allocation4 + $0x8] sm:$0xff] %vm273, 0.0
        %276 = vst.msk [vmem:[#allocation4 + $0x10] sm:$0xff] %vm273, 0.0
        %277 = vst.msk [vmem:[#allocation4 + $0x18] sm:$0xff] %vm273, 0.0
      $region36: #{multi_headed_attention.8} parent=31 // pred_fallthru
        _
      %v278 = vld [vmem:[%s238] sm:$0xff]
      %v279 = vld [vmem:[%s245] sm:$0xff]
      %v280 = vld [vmem:[%s252] sm:$0xff]
      %vm281 = vcmask 64512
      %v283 = vsel %vm281, %v278, 0
      %v286 = vsel %vm281, %v279, 0
      %288 = vmatpush.xpose.msra.mxu0 0.0
      %289 = vmatpush.xpose.msra.mxu0 0.0
      %290 = vmatpush.xpose.msra.mxu0 0.0
      %291 = vmatpush.xpose.msra.mxu0 0.0
      %292 = vmatpush.xpose.msra.mxu0 0.0
      %293 = vmatpush.xpose.msra.mxu0 0.0
      %294 = vmatpush.xpose.msra.mxu0 0.0
      %295 = vmatpush.xpose.msra.mxu0 0.0
      %296 = vmatpush.xpose.msra.mxu0 0.0
      %297 = vmatpush.xpose.msra.mxu0 0.0
      %298 = vmatpush.xpose.msra.mxu0 0.0
      %299 = vmatpush.xpose.msra.mxu0 0.0
      %300 = vmatpush.xpose.msra.mxu0 0.0
      %301 = vmatpush.xpose.msra.mxu0 0.0
      %302 = vmatpush.xpose.msra.mxu0 0.0
      %303 = vmatpush.xpose.msra.mxu0 %v286
      %304 = vmatmul.f32.gmra.mxu0 %v283
      %v305 = vpop.f32.mrf.mxu0
      %v306 = vadd.f32 0.0, %v305
      %307 = vdwg.mxu0
      %v308 = vmul.f32 %v306, 0.35355338
      %v309 = vld [vmem:[#allocation2] sm:$0xff]
      %v310 = vsel %vm281, %v308, -inf
      %311 = vmax.xlane.f32.xlu0 %v310
      %v312 = vpop.xlane.xlu0 %311
      %v313 = vmax.f32 %v309, %v312
      %v314 = vsub.f32 %v309, %v313
      %v315 = vmul.f32 %v314, 1.442695
      %v316 = vpow.pop %v315
      %318 = vset.pattern.permute.xlu0 0
      %319 = vperm.xlu0 %318, %v313
      %v320 = vpop.permute.xlu0 %319
      %v322 = vsub.f32 %v308, %v320
      %v323 = vmul.f32 %v322, 1.442695
      %v324 = vpow.pop %v323
      %v325 = vld [vmem:[#allocation3] sm:$0xff]
      %v326 = vmul.f32 %v316, %v325
      %v327 = vsel %vm281, %v324, 0.0
      %328 = vadd.xlane.f32.xlu0 %v327
      %v329 = vpop.xlane.xlu0 %328
      %v330 = vadd.f32 %v326, %v329
      %vm331 = vcmask 7168
      %332 = vst.msk [vmem:[#allocation3] sm:$0xff] %vm331, %v330
      %v333 = vld [vmem:[#allocation4] sm:$0xff]
      %335 = vset.pattern.permute.xlu0 0
      %336 = vperm.xlu0 %335, %v316
      %v337 = vpop.permute.xlu0 %336
      %v339 = vmul.f32 %v337, %v333
      %v341 = vsel %vm281, %v324, 0
      %343 = vmatpush.msra.mxu0 0.0
      %344 = vmatpush.msra.mxu0 0.0
      %345 = vmatpush.msra.mxu0 0.0
      %346 = vmatpush.msra.mxu0 0.0
      %347 = vmatpush.msra.mxu0 0.0
      %348 = vmatpush.msra.mxu0 0.0
      %349 = vmatpush.msra.mxu0 0.0
      %350 = vmatpush.msra.mxu0 0.0
      %351 = vmatpush.msra.mxu0 0.0
      %352 = vmatpush.msra.mxu0 0.0
      %353 = vmatpush.msra.mxu0 0.0
      %354 = vmatpush.msra.mxu0 0.0
      %355 = vmatpush.msra.mxu0 0.0
      %356 = vmatpush.msra.mxu0 0.0
      %357 = vmatpush.msra.mxu0 0.0
      %358 = vmatpush.msra.mxu0 %v280
      %359 = vmatmul.f32.gmra.mxu0 %v341
      %v360 = vpop.f32.mrf.mxu0
      %v361 = vadd.f32 0.0, %v360
      %362 = vdwg.mxu0
      %v363 = vadd.f32 %v339, %v361
      %364 = vst.msk [vmem:[#allocation4] sm:$0xff] %vm281, %v363
      %365 = vst.msk [vmem:[#allocation2] sm:$0xff] %vm331, %v313
      %366 = vrot.lane.b32.xlu0 %v278, 120
      %v367 = vpop.permute.xlu0 %366
      %368 = vrot.lane.b32.xlu0 %v279, 120
      %v369 = vpop.permute.xlu0 %368
      %v370 = vsel %vm281, %v367, 0
      %v372 = vsel %vm281, %v369, 0
      %374 = vmatpush.xpose.msra.mxu0 0.0
      %375 = vmatpush.xpose.msra.mxu0 0.0
      %376 = vmatpush.xpose.msra.mxu0 0.0
      %377 = vmatpush.xpose.msra.mxu0 0.0
      %378 = vmatpush.xpose.msra.mxu0 0.0
      %379 = vmatpush.xpose.msra.mxu0 0.0
      %380 = vmatpush.xpose.msra.mxu0 0.0
      %381 = vmatpush.xpose.msra.mxu0 0.0
      %382 = vmatpush.xpose.msra.mxu0 0.0
      %383 = vmatpush.xpose.msra.mxu0 0.0
      %384 = vmatpush.xpose.msra.mxu0 0.0
      %385 = vmatpush.xpose.msra.mxu0 0.0
      %386 = vmatpush.xpose.msra.mxu0 0.0
      %387 = vmatpush.xpose.msra.mxu0 0.0
      %388 = vmatpush.xpose.msra.mxu0 0.0
      %389 = vmatpush.xpose.msra.mxu0 %v372
      %390 = vmatmul.f32.gmra.mxu0 %v370
      %v391 = vpop.f32.mrf.mxu0
      %v392 = vadd.f32 0.0, %v391
      %393 = vdwg.mxu0
      %v394 = vmul.f32 %v392, 0.35355338
      %s395 = scalar_lea.vmem [#allocation2], 8
      %v396 = vld [vmem:[%s395] sm:$0xff]
      %v397 = vsel %vm281, %v394, -inf
      %398 = vmax.xlane.f32.xlu0 %v397
      %v399 = vpop.xlane.xlu0 %398
      %v400 = vmax.f32 %v396, %v399
      %v401 = vsub.f32 %v396, %v400
      %v402 = vmul.f32 %v401, 1.442695
      %v403 = vpow.pop %v402
      %405 = vset.pattern.permute.xlu0 0
      %406 = vperm.xlu0 %405, %v400
      %v407 = vpop.permute.xlu0 %406
      %v409 = vsub.f32 %v394, %v407
      %v410 = vmul.f32 %v409, 1.442695
      %v411 = vpow.pop %v410
      %s412 = scalar_lea.vmem [#allocation3], 8
      %v413 = vld [vmem:[%s412] sm:$0xff]
      %v414 = vmul.f32 %v403, %v413
      %v415 = vsel %vm281, %v411, 0.0
      %416 = vadd.xlane.f32.xlu0 %v415
      %v417 = vpop.xlane.xlu0 %416
      %v418 = vadd.f32 %v414, %v417
      %419 = vst.msk [vmem:[%s412] sm:$0xff] %vm331, %v418
      %s420 = scalar_lea.vmem [#allocation4], 8
      %v421 = vld [vmem:[%s420] sm:$0xff]
      %423 = vset.pattern.permute.xlu0 0
      %424 = vperm.xlu0 %423, %v403
      %v425 = vpop.permute.xlu0 %424
      %v427 = vmul.f32 %v425, %v421
      %429 = vrot.lane.b32.xlu0 %v280, 120
      %v430 = vpop.permute.xlu0 %429
      %v433 = vsel %vm281, %v411, 0
      %435 = vmatpush.msra.mxu0 0.0
      %436 = vmatpush.msra.mxu0 0.0
      %437 = vmatpush.msra.mxu0 0.0
      %438 = vmatpush.msra.mxu0 0.0
      %439 = vmatpush.msra.mxu0 0.0
      %440 = vmatpush.msra.mxu0 0.0
      %441 = vmatpush.msra.mxu0 0.0
      %442 = vmatpush.msra.mxu0 0.0
      %443 = vmatpush.msra.mxu0 0.0
      %444 = vmatpush.msra.mxu0 0.0
      %445 = vmatpush.msra.mxu0 0.0
      %446 = vmatpush.msra.mxu0 0.0
      %447 = vmatpush.msra.mxu0 0.0
      %448 = vmatpush.msra.mxu0 0.0
      %449 = vmatpush.msra.mxu0 0.0
      %450 = vmatpush.msra.mxu0 %v430
      %451 = vmatmul.f32.gmra.mxu0 %v433
      %v452 = vpop.f32.mrf.mxu0
      %v453 = vadd.f32 0.0, %v452
      %454 = vdwg.mxu0
      %v455 = vadd.f32 %v427, %v453
      %456 = vst.msk [vmem:[%s420] sm:$0xff] %vm281, %v455
      %457 = vst.msk [vmem:[%s395] sm:$0xff] %vm331, %v400
      %458 = vrot.lane.b32.xlu0 %v278, 112
      %v459 = vpop.permute.xlu0 %458
      %460 = vrot.lane.b32.xlu0 %v279, 112
      %v461 = vpop.permute.xlu0 %460
      %v462 = vsel %vm281, %v459, 0
      %v464 = vsel %vm281, %v461, 0
      %466 = vmatpush.xpose.msra.mxu0 0.0
      %467 = vmatpush.xpose.msra.mxu0 0.0
      %468 = vmatpush.xpose.msra.mxu0 0.0
      %469 = vmatpush.xpose.msra.mxu0 0.0
      %470 = vmatpush.xpose.msra.mxu0 0.0
      %471 = vmatpush.xpose.msra.mxu0 0.0
      %472 = vmatpush.xpose.msra.mxu0 0.0
      %473 = vmatpush.xpose.msra.mxu0 0.0
      %474 = vmatpush.xpose.msra.mxu0 0.0
      %475 = vmatpush.xpose.msra.mxu0 0.0
      %476 = vmatpush.xpose.msra.mxu0 0.0
      %477 = vmatpush.xpose.msra.mxu0 0.0
      %478 = vmatpush.xpose.msra.mxu0 0.0
      %479 = vmatpush.xpose.msra.mxu0 0.0
      %480 = vmatpush.xpose.msra.mxu0 0.0
      %481 = vmatpush.xpose.msra.mxu0 %v464
      %482 = vmatmul.f32.gmra.mxu0 %v462
      %v483 = vpop.f32.mrf.mxu0
      %v484 = vadd.f32 0.0, %v483
      %485 = vdwg.mxu0
      %v486 = vmul.f32 %v484, 0.35355338
      %s487 = scalar_lea.vmem [#allocation2], 16
      %v488 = vld [vmem:[%s487] sm:$0xff]
      %v489 = vsel %vm281, %v486, -inf
      %490 = vmax.xlane.f32.xlu0 %v489
      %v491 = vpop.xlane.xlu0 %490
      %v492 = vmax.f32 %v488, %v491
      %v493 = vsub.f32 %v488, %v492
      %v494 = vmul.f32 %v493, 1.442695
      %v495 = vpow.pop %v494
      %497 = vset.pattern.permute.xlu0 0
      %498 = vperm.xlu0 %497, %v492
      %v499 = vpop.permute.xlu0 %498
      %v501 = vsub.f32 %v486, %v499
      %v502 = vmul.f32 %v501, 1.442695
      %v503 = vpow.pop %v502
      %s504 = scalar_lea.vmem [#allocation3], 16
      %v505 = vld [vmem:[%s504] sm:$0xff]
      %v506 = vmul.f32 %v495, %v505
      %v507 = vsel %vm281, %v503, 0.0
      %508 = vadd.xlane.f32.xlu0 %v507
      %v509 = vpop.xlane.xlu0 %508
      %v510 = vadd.f32 %v506, %v509
      %511 = vst.msk [vmem:[%s504] sm:$0xff] %vm331, %v510
      %s512 = scalar_lea.vmem [#allocation4], 16
      %v513 = vld [vmem:[%s512] sm:$0xff]
      %515 = vset.pattern.permute.xlu0 0
      %516 = vperm.xlu0 %515, %v495
      %v517 = vpop.permute.xlu0 %516
      %v519 = vmul.f32 %v517, %v513
      %520 = vrot.lane.b32.xlu0 %v280, 112
      %v521 = vpop.permute.xlu0 %520
      %v524 = vsel %vm281, %v503, 0
      %526 = vmatpush.msra.mxu0 0.0
      %527 = vmatpush.msra.mxu0 0.0
      %528 = vmatpush.msra.mxu0 0.0
      %529 = vmatpush.msra.mxu0 0.0
      %530 = vmatpush.msra.mxu0 0.0
      %531 = vmatpush.msra.mxu0 0.0
      %532 = vmatpush.msra.mxu0 0.0
      %533 = vmatpush.msra.mxu0 0.0
      %534 = vmatpush.msra.mxu0 0.0
      %535 = vmatpush.msra.mxu0 0.0
      %536 = vmatpush.msra.mxu0 0.0
      %537 = vmatpush.msra.mxu0 0.0
      %538 = vmatpush.msra.mxu0 0.0
      %539 = vmatpush.msra.mxu0 0.0
      %540 = vmatpush.msra.mxu0 0.0
      %541 = vmatpush.msra.mxu0 %v521
      %542 = vmatmul.f32.gmra.mxu0 %v524
      %v543 = vpop.f32.mrf.mxu0
      %v544 = vadd.f32 0.0, %v543
      %545 = vdwg.mxu0
      %v546 = vadd.f32 %v519, %v544
      %547 = vst.msk [vmem:[%s512] sm:$0xff] %vm281, %v546
      %548 = vst.msk [vmem:[%s487] sm:$0xff] %vm331, %v492
      %549 = vrot.lane.b32.xlu0 %v278, 104
      %v550 = vpop.permute.xlu0 %549
      %551 = vrot.lane.b32.xlu0 %v279, 104
      %v552 = vpop.permute.xlu0 %551
      %v553 = vsel %vm281, %v550, 0
      %v555 = vsel %vm281, %v552, 0
      %557 = vmatpush.xpose.msra.mxu0 0.0
      %558 = vmatpush.xpose.msra.mxu0 0.0
      %559 = vmatpush.xpose.msra.mxu0 0.0
      %560 = vmatpush.xpose.msra.mxu0 0.0
      %561 = vmatpush.xpose.msra.mxu0 0.0
      %562 = vmatpush.xpose.msra.mxu0 0.0
      %563 = vmatpush.xpose.msra.mxu0 0.0
      %564 = vmatpush.xpose.msra.mxu0 0.0
      %565 = vmatpush.xpose.msra.mxu0 0.0
      %566 = vmatpush.xpose.msra.mxu0 0.0
      %567 = vmatpush.xpose.msra.mxu0 0.0
      %568 = vmatpush.xpose.msra.mxu0 0.0
      %569 = vmatpush.xpose.msra.mxu0 0.0
      %570 = vmatpush.xpose.msra.mxu0 0.0
      %571 = vmatpush.xpose.msra.mxu0 0.0
      %572 = vmatpush.xpose.msra.mxu0 %v555
      %573 = vmatmul.f32.gmra.mxu0 %v553
      %v574 = vpop.f32.mrf.mxu0
      %v575 = vadd.f32 0.0, %v574
      %576 = vdwg.mxu0
      %v577 = vmul.f32 %v575, 0.35355338
      %s578 = scalar_lea.vmem [#allocation2], 24
      %v579 = vld [vmem:[%s578] sm:$0xff]
      %v580 = vsel %vm281, %v577, -inf
      %581 = vmax.xlane.f32.xlu0 %v580
      %v582 = vpop.xlane.xlu0 %581
      %v583 = vmax.f32 %v579, %v582
      %v584 = vsub.f32 %v579, %v583
      %v585 = vmul.f32 %v584, 1.442695
      %v586 = vpow.pop %v585
      %588 = vset.pattern.permute.xlu0 0
      %589 = vperm.xlu0 %588, %v583
      %v590 = vpop.permute.xlu0 %589
      %v592 = vsub.f32 %v577, %v590
      %v593 = vmul.f32 %v592, 1.442695
      %v594 = vpow.pop %v593
      %s595 = scalar_lea.vmem [#allocation3], 24
      %v596 = vld [vmem:[%s595] sm:$0xff]
      %v597 = vmul.f32 %v586, %v596
      %v598 = vsel %vm281, %v594, 0.0
      %599 = vadd.xlane.f32.xlu0 %v598
      %v600 = vpop.xlane.xlu0 %599
      %v601 = vadd.f32 %v597, %v600
      %602 = vst.msk [vmem:[%s595] sm:$0xff] %vm331, %v601
      %s603 = scalar_lea.vmem [#allocation4], 24
      %v604 = vld [vmem:[%s603] sm:$0xff]
      %606 = vset.pattern.permute.xlu0 0
      %607 = vperm.xlu0 %606, %v586
      %v608 = vpop.permute.xlu0 %607
      %v610 = vmul.f32 %v608, %v604
      %611 = vrot.lane.b32.xlu0 %v280, 104
      %v612 = vpop.permute.xlu0 %611
      %v615 = vsel %vm281, %v594, 0
      %617 = vmatpush.msra.mxu0 0.0
      %618 = vmatpush.msra.mxu0 0.0
      %619 = vmatpush.msra.mxu0 0.0
      %620 = vmatpush.msra.mxu0 0.0
      %621 = vmatpush.msra.mxu0 0.0
      %622 = vmatpush.msra.mxu0 0.0
      %623 = vmatpush.msra.mxu0 0.0
      %624 = vmatpush.msra.mxu0 0.0
      %625 = vmatpush.msra.mxu0 0.0
      %626 = vmatpush.msra.mxu0 0.0
      %627 = vmatpush.msra.mxu0 0.0
      %628 = vmatpush.msra.mxu0 0.0
      %629 = vmatpush.msra.mxu0 0.0
      %630 = vmatpush.msra.mxu0 0.0
      %631 = vmatpush.msra.mxu0 0.0
      %632 = vmatpush.msra.mxu0 %v612
      %633 = vmatmul.f32.gmra.mxu0 %v615
      %v634 = vpop.f32.mrf.mxu0
      %v635 = vadd.f32 0.0, %v634
      %636 = vdwg.mxu0
      %v637 = vadd.f32 %v610, %v635
      %638 = vst.msk [vmem:[%s603] sm:$0xff] %vm281, %v637
      %639 = vst.msk [vmem:[%s578] sm:$0xff] %vm331, %v583
      // Predicated region
      $region37: #{multi_headed_attention.8} parent=31 // pred_check
        %p640 = pneg %p260
      $region38: #{multi_headed_attention.8} parent=31 // pred_check_branch
        %642 = sbr.rel (%p640) target = $region40
      $region39: #{multi_headed_attention.8} parent=31 // pred_region
        %v643 = vld [vmem:[#allocation3] sm:$0xff]
        %v644 = vrcp.pop %v643
        %v645 = vld [vmem:[#allocation4] sm:$0xff]
        %647 = vset.pattern.permute.xlu0 0
        %648 = vperm.xlu0 %647, %v644
        %v649 = vpop.permute.xlu0 %648
        %v651 = vmul.f32 %v645, %v649
        %v652 = vld [vmem:[%s412] sm:$0xff]
        %v653 = vrcp.pop %v652
        %v654 = vld [vmem:[%s420] sm:$0xff]
        %656 = vset.pattern.permute.xlu0 0
        %657 = vperm.xlu0 %656, %v653
        %v658 = vpop.permute.xlu0 %657
        %v660 = vmul.f32 %v654, %v658
        %v661 = vld [vmem:[%s504] sm:$0xff]
        %v662 = vrcp.pop %v661
        %v663 = vld [vmem:[%s512] sm:$0xff]
        %665 = vset.pattern.permute.xlu0 0
        %666 = vperm.xlu0 %665, %v662
        %v667 = vpop.permute.xlu0 %666
        %v669 = vmul.f32 %v663, %v667
        %v670 = vld [vmem:[%s595] sm:$0xff]
        %v671 = vrcp.pop %v670
        %v672 = vld [vmem:[%s603] sm:$0xff]
        %674 = vset.pattern.permute.xlu0 0
        %675 = vperm.xlu0 %674, %v671
        %v676 = vpop.permute.xlu0 %675
        %v678 = vmul.f32 %v672, %v676
        %680 = vrot.lane.b32.xlu0 %v660, 8
        %v681 = vpop.permute.xlu0 %680
        %684 = vrot.lane.b32.xlu0 %v669, 16
        %v685 = vpop.permute.xlu0 %684
        %688 = vrot.lane.b32.xlu0 %v678, 24
        %v689 = vpop.permute.xlu0 %688
        %v691 = vsel %vm281, %v651, %v681
        %vm692 = vcmask 130048
        %v693 = vsel %vm692, %v691, %v685
        %vm694 = vcmask 195584
        %v695 = vsel %vm694, %v693, %v689
        %vm696 = vcmask 261120
        %697 = vst.msk [vmem:[%s259] sm:$0xff] %vm696, %v695
      $region40: #{multi_headed_attention.8} parent=31 // pred_fallthru
        _
      %p698 = scmp.lt.s32.totalorder %s19, 1
      %s699 = scalar_select %p698, %s19, 1
      %p700 = scmp.lt.s32.totalorder %s20, 0
      %s701 = scalar_select %p700, %s20, 0
      %s702 = sadd.s32 %s701, %s699
      %s703 = smul.addr %s702, 8
      %s704 = scalar_lea.vmem %s3, %s703
      // Predicated region
      $region41: #{multi_headed_attention.8} parent=31 // pred_check
        %p705 = pneg %p137
      $region42: #{multi_headed_attention.8} parent=31 // pred_check_branch
        %707 = sbr.rel (%p705) target = $region44
      $region43: #{multi_headed_attention.8} parent=31 // pred_region
        _
      $region44: #{multi_headed_attention.8} parent=31 // pred_fallthru
        _
    $region32: #{multi_headed_attention.8} parent=5 // pred_fallthru
      _
    %p708 = scmp.le.s32.totalorder 2, %s9
    // Predicated region
    $region45: #{multi_headed_attention.8} parent=5 // pred_check
      %p709 = pneg %p708
    $region46: #{multi_headed_attention.8} parent=5 // pred_check_branch
      %711 = sbr.rel (%p709) target = $region48
    $region47: #{multi_headed_attention.8} parent=5 // pred_region
      %s712 = ssub.s32 %s9, 2
      // Predicated region
      $region49: #{multi_headed_attention.8} parent=47 // pred_check
        %p713 = pneg %p143
      $region50: #{multi_headed_attention.8} parent=47 // pred_check_branch
        %715 = sbr.rel (%p713) target = $region52
      $region51: #{multi_headed_attention.8} parent=47 // pred_region
        %p716 = scmp.lt.s32.totalorder %s22, 1
        %s717 = scalar_select %p716, %s22, 1
        %p718 = scmp.lt.s32.totalorder %s23, 0
        %s719 = scalar_select %p718, %s23, 0
        %s720 = sadd.s32 %s719, %s717
        %s721 = smul.addr %s720, 8
        %s722 = scalar_lea.vmem %s3, %s721
      $region52: #{multi_headed_attention.8} parent=47 // pred_fallthru
        _
    $region48: #{multi_headed_attention.8} parent=5 // pred_fallthru
      _
  $region6: #{multi_headed_attention.8} parent=0 // loop_footer
    %s13 = sadd.s32 1, %s9
  $region7: #{multi_headed_attention.8} parent=0 // loop_footer_branch
    %8 = sbr.rel target = $region3
  $region8: #{multi_headed_attention.8} parent=0 // loop_exit
    _

</llo_original>
